<compile_context>
chip_gen: v5e
topology: v5e:2x2
jax: 0.10.0
libtpu: 0.0.40
codegen_flags: <defaults>
</compile_context>

<pallas_src>
import jax
import jax.numpy as jnp
import numpy as np
from jax.experimental import pallas as pl
from jax.experimental.pallas import tpu as pltpu


# ----------------------------------------------------------------------------- kernel
def _bilstm_kernel(x_ref,       # (T*B, D)  bf16, time-major: rows t*B:(t+1)*B hold x[:, t, :]
                   wi_f_ref,    # (D, 4H)   bf16  input weights, fwd dir, gate order [i|f|o|g]
                   wi_b_ref,    # (D, 4H)   bf16  input weights, bwd dir
                   wr_f_ref,    # (H, 4H)   bf16  recurrent weights, fwd dir
                   wr_b_ref,    # (H, 4H)   bf16  recurrent weights, bwd dir
                   b_f_ref,     # (1, 4H)   f32   folded bias (bih + bhh), fwd dir
                   b_b_ref,     # (1, 4H)   f32   folded bias, bwd dir
                   wl_f_ref,    # (H, out)  bf16  head weight rows acting on h_fwd
                   wl_b_ref,    # (H, out)  bf16  head weight rows acting on h_bwd
                   b_last_ref,  # (1, out)  f32
                   out_ref):    # (B, out)  f32
    TB, _ = x_ref.shape
    B = out_ref.shape[0]
    T = TB // B
    H = wr_f_ref.shape[0]
    G = 4 * H

    bf16 = jnp.bfloat16
    f32 = jnp.float32

    # Load weights once; pre-broadcast the biases so no broadcast_in_dim lands in the loop.
    wi_f, wi_b = wi_f_ref[...], wi_b_ref[...]
    wr_f, wr_b = wr_f_ref[...], wr_b_ref[...]
    b_f = jnp.broadcast_to(b_f_ref[...], (B, G))
    b_b = jnp.broadcast_to(b_b_ref[...], (B, G))

    h_f = jnp.zeros((B, H), f32)
    c_f = jnp.zeros((B, H), f32)
    h_b = jnp.zeros((B, H), f32)
    c_b = jnp.zeros((B, H), f32)

    def cell(x_rows, w_in, bias, h, c, w_rec):
        # The x-projection is h-independent: the scheduler pulls it off the recurrent
        # critical path (it overlaps the previous step's EUP/VPU work).
        gates = (jnp.dot(x_rows, w_in, preferred_element_type=f32) + bias
                 + jnp.dot(h.astype(bf16), w_rec, preferred_element_type=f32))  # (B, 4H)
        sig = jax.nn.sigmoid(gates[:, :3 * H])     # i | f | o   (one EUP pass, 3H lanes)
        g = jnp.tanh(gates[:, 3 * H:])             # g           (H lanes)
        i = sig[:, :H]
        f = sig[:, H:2 * H]
        o = sig[:, 2 * H:3 * H]
        c = f * c + i * g
        h = o * jnp.tanh(c)
        return h, c

    # T is small and static -> Python unroll (full DAG visible to the LLO scheduler, so
    # the two independent direction chains interleave).
    for t in range(T):
        h_f, c_f = cell(x_ref[t * B:(t + 1) * B, :], wi_f, b_f, h_f, c_f, wr_f)
        h_b, c_b = cell(x_ref[(T - 1 - t) * B:(T - t) * B, :], wi_b, b_b, h_b, c_b, wr_b)

    # out = cat(h_fwd, h_bwd) @ W_last.T + b_last, with W_last pre-split by rows so no
    # lane concat is needed.  Dropout(0.0) is the identity.
    out_ref[...] = (jnp.dot(h_f.astype(bf16), wl_f_ref[...], preferred_element_type=f32)
                    + jnp.dot(h_b.astype(bf16), wl_b_ref[...], preferred_element_type=f32)
                    + b_last_ref[...])


# ---------------------------------------------------------------- one-time weight packing
def pack_params(params):
    """Repack PyTorch-layout parameters into MXU-friendly bf16 arrays.

    Runs ONCE at init (hoisted out of the per-call jit).  Gate order per direction is
    changed from PyTorch's [i, f, g, o] to [i, f, o, g] so the sigmoid gates are
    contiguous; the two LSTM biases are folded; the head weight is split per direction.
    """
    H = params["whh_f"].shape[1]
    bf16, f32 = jnp.bfloat16, jnp.float32

    def regate(w):                       # (rows, 4H) [i,f,g,o] -> [i,f,o,g]
        i, f, g, o = jnp.split(w, 4, axis=1)
        return jnp.concatenate([i, f, o, g], axis=1)

    return {
        "wi_f": regate(params["wih_f"].T).astype(bf16),                           # (D, 4H)
        "wi_b": regate(params["wih_b"].T).astype(bf16),
        "wr_f": regate(params["whh_f"].T).astype(bf16),                           # (H, 4H)
        "wr_b": regate(params["whh_b"].T).astype(bf16),
        "b_f": regate((params["bih_f"] + params["bhh_f"]).reshape(1, -1)).astype(f32),
        "b_b": regate((params["bih_b"] + params["bhh_b"]).reshape(1, -1)).astype(f32),
        "wl_f": params["w_last"][:, :H].T.astype(bf16),                           # (H, out)
        "wl_b": params["w_last"][:, H:].T.astype(bf16),
        "b_last": params["b_last"].reshape(1, -1).astype(f32),                    # (1, out)
    }


# ---------------------------------------------------------------------------- wrapper
@jax.jit
def lstm_forward(x, packed):
    """x: (B, T, D) float32; packed: output of pack_params().  Returns (B, out_dim) f32."""
    B, T, D = x.shape
    out_dim = packed["b_last"].shape[1]

    # Time-major rows so each timestep is a contiguous (B, D) slab inside the kernel.
    x_tm = jnp.transpose(x, (1, 0, 2)).reshape(T * B, D).astype(jnp.bfloat16)

    vmem = pl.BlockSpec(memory_space=pltpu.MemorySpace.VMEM)
    return pl.pallas_call(
        _bilstm_kernel,
        out_shape=jax.ShapeDtypeStruct((B, out_dim), jnp.float32),
        in_specs=[vmem] * 10,
        out_specs=vmem,
    )(x_tm, packed["wi_f"], packed["wi_b"], packed["wr_f"], packed["wr_b"],
      packed["b_f"], packed["b_b"], packed["wl_f"], packed["wl_b"], packed["b_last"])


# --------------------------------------------------------------------- pure-JAX reference
def lstm_reference(x, params):
    """fp32 reference with PyTorch nn.LSTM semantics (batch_first, bidirectional)."""
    B, T, D = x.shape
    H = params["whh_f"].shape[0] // 4

    def run_dir(xs, wih, whh, bih, bhh):
        h = jnp.zeros((B, H), jnp.float32)
        c = jnp.zeros((B, H), jnp.float32)
        for t in range(xs.shape[1]):
            gates = xs[:, t, :] @ wih.T + h @ whh.T + bih + bhh
            i = jax.nn.sigmoid(gates[:, 0 * H:1 * H])
            f = jax.nn.sigmoid(gates[:, 1 * H:2 * H])
            g = jnp.tanh(gates[:, 2 * H:3 * H])
            o = jax.nn.sigmoid(gates[:, 3 * H:4 * H])
            c = f * c + i * g
            h = o * jnp.tanh(c)
        return h

    h_f = run_dir(x, params["wih_f"], params["whh_f"], params["bih_f"], params["bhh_f"])
    h_b = run_dir(x[:, ::-1, :], params["wih_b"], params["whh_b"],
                  params["bih_b"], params["bhh_b"])
    h_cat = jnp.concatenate([h_f, h_b], axis=1)
    return h_cat @ params["w_last"].T + params["b_last"]


# ------------------------------------------------------------------------------- main
def make_params(key, input_dim, hidden_size, out_dim):
    """Deterministic init in PyTorch parameter shapes (U(-1/sqrt(H), 1/sqrt(H)))."""
    H, D = hidden_size, input_dim
    k = 1.0 / np.sqrt(H)
    names_shapes = [
        ("wih_f", (4 * H, D)), ("whh_f", (4 * H, H)), ("bih_f", (4 * H,)), ("bhh_f", (4 * H,)),
        ("wih_b", (4 * H, D)), ("whh_b", (4 * H, H)), ("bih_b", (4 * H,)), ("bhh_b", (4 * H,)),
        ("w_last", (out_dim, 2 * H)), ("b_last", (out_dim,)),
    ]
    params = {}
    keys = jax.random.split(key, len(names_shapes))
    for (name, shape), kk in zip(names_shapes, keys):
        params[name] = jax.random.uniform(kk, shape, jnp.float32, minval=-k, maxval=k)
    return params


if __name__ == "__main__":
    B, T, D, H, OUT = 2, 8, 4, 32, 2

    key = jax.random.PRNGKey(0)
    kx, kp = jax.random.split(key)
    x = jax.random.normal(kx, (B, T, D), jnp.float32)
    params = make_params(kp, D, H, OUT)

    packed = pack_params(params)              # one-time repack, off the per-call path
    out = lstm_forward(x, packed)
    out = jax.block_until_ready(out)

    ref = lstm_reference(x, params)
    # Kernel uses bf16 MXU operands (fp32 accumulate); vs. the fp32 reference the
    # divergence at these shapes is O(1e-3), so 1e-2 leaves ample margin.
    np.testing.assert_allclose(np.asarray(out), np.asarray(ref), rtol=1e-2, atol=1e-2)

    print("KERNEL_OK")
</pallas_src>

<mosaic_0001>
module attributes {stable_mosaic.version = 11 : i64} {
  func.func @_bilstm_kernel(%arg0: memref<16x4xbf16, #tpu.memory_space<vmem>>, %arg1: memref<4x128xbf16, #tpu.memory_space<vmem>>, %arg2: memref<4x128xbf16, #tpu.memory_space<vmem>>, %arg3: memref<32x128xbf16, #tpu.memory_space<vmem>>, %arg4: memref<32x128xbf16, #tpu.memory_space<vmem>>, %arg5: memref<1x128xf32, #tpu.memory_space<vmem>>, %arg6: memref<1x128xf32, #tpu.memory_space<vmem>>, %arg7: memref<32x2xbf16, #tpu.memory_space<vmem>>, %arg8: memref<32x2xbf16, #tpu.memory_space<vmem>>, %arg9: memref<1x2xf32, #tpu.memory_space<vmem>>, %arg10: memref<2x2xf32, #tpu.memory_space<vmem>>) attributes {dimension_semantics = [], scalar_prefetch = 0 : i64, scratch_operands = 0 : i64, tpu.core_type = #tpu.core_type<tc>} {
    %c0 = arith.constant 0 : index
    %c0_0 = arith.constant 0 : index
    %0 = vector.load %arg1[%c0, %c0_0] : memref<4x128xbf16, #tpu.memory_space<vmem>>, vector<4x128xbf16>
    %c0_1 = arith.constant 0 : index
    %c0_2 = arith.constant 0 : index
    %1 = vector.load %arg2[%c0_1, %c0_2] : memref<4x128xbf16, #tpu.memory_space<vmem>>, vector<4x128xbf16>
    %c0_3 = arith.constant 0 : index
    %c0_4 = arith.constant 0 : index
    %2 = vector.load %arg3[%c0_3, %c0_4] : memref<32x128xbf16, #tpu.memory_space<vmem>>, vector<32x128xbf16>
    %c0_5 = arith.constant 0 : index
    %c0_6 = arith.constant 0 : index
    %3 = vector.load %arg4[%c0_5, %c0_6] : memref<32x128xbf16, #tpu.memory_space<vmem>>, vector<32x128xbf16>
    %c0_7 = arith.constant 0 : index
    %c0_8 = arith.constant 0 : index
    %4 = vector.load %arg5[%c0_7, %c0_8] : memref<1x128xf32, #tpu.memory_space<vmem>>, vector<1x128xf32>
    %5 = vector.shape_cast %4 : vector<1x128xf32> to vector<1x128xf32>
    %6 = vector.broadcast %5 : vector<1x128xf32> to vector<2x128xf32>
    %c0_9 = arith.constant 0 : index
    %c0_10 = arith.constant 0 : index
    %7 = vector.load %arg6[%c0_9, %c0_10] : memref<1x128xf32, #tpu.memory_space<vmem>>, vector<1x128xf32>
    %8 = vector.shape_cast %7 : vector<1x128xf32> to vector<1x128xf32>
    %9 = vector.broadcast %8 : vector<1x128xf32> to vector<2x128xf32>
    %cst = arith.constant 0.000000e+00 : f32
    %10 = vector.broadcast %cst : f32 to vector<2x32xf32>
    %cst_11 = arith.constant 0.000000e+00 : f32
    %11 = vector.broadcast %cst_11 : f32 to vector<2x32xf32>
    %cst_12 = arith.constant 0.000000e+00 : f32
    %12 = vector.broadcast %cst_12 : f32 to vector<2x32xf32>
    %cst_13 = arith.constant 0.000000e+00 : f32
    %13 = vector.broadcast %cst_13 : f32 to vector<2x32xf32>
    %c0_14 = arith.constant 0 : index
    %c0_15 = arith.constant 0 : index
    %14 = vector.load %arg0[%c0_14, %c0_15] : memref<16x4xbf16, #tpu.memory_space<vmem>>, vector<2x4xbf16>
    %cst_16 = arith.constant dense<0.000000e+00> : vector<2x128xf32>
    %15 = tpu.matmul %14, %0, %cst_16 {dimension_numbers = #tpu.dot_dimension_numbers<[1], [0], [0], [1], [0, 0, 1, 1], [], []>} : vector<2x4xbf16>, vector<4x128xbf16>, vector<2x128xf32> -> vector<2x128xf32>
    %16 = arith.addf %15, %6 : vector<2x128xf32>
    %17 = arith.truncf %10 : vector<2x32xf32> to vector<2x32xbf16>
    %cst_17 = arith.constant dense<0.000000e+00> : vector<2x128xf32>
    %18 = tpu.matmul %17, %2, %cst_17 {dimension_numbers = #tpu.dot_dimension_numbers<[1], [0], [0], [1], [0, 0, 1, 1], [], []>} : vector<2x32xbf16>, vector<32x128xbf16>, vector<2x128xf32> -> vector<2x128xf32>
    %19 = arith.addf %16, %18 : vector<2x128xf32>
    %20 = vector.extract_strided_slice %19 {offsets = [0, 0], sizes = [2, 96], strides = [1, 1]} : vector<2x128xf32> to vector<2x96xf32>
    %21 = arith.negf %20 : vector<2x96xf32>
    %22 = math.exp %21 : vector<2x96xf32>
    %cst_18 = arith.constant 1.000000e+00 : f32
    %23 = vector.broadcast %cst_18 : f32 to vector<2x96xf32>
    %24 = arith.addf %23, %22 : vector<2x96xf32>
    %25 = arith.divf %23, %24 : vector<2x96xf32>
    %26 = vector.extract_strided_slice %19 {offsets = [0, 96], sizes = [2, 32], strides = [1, 1]} : vector<2x128xf32> to vector<2x32xf32>
    %27 = math.tanh %26 : vector<2x32xf32>
    %28 = vector.extract_strided_slice %25 {offsets = [0, 0], sizes = [2, 32], strides = [1, 1]} : vector<2x96xf32> to vector<2x32xf32>
    %29 = vector.extract_strided_slice %25 {offsets = [0, 32], sizes = [2, 32], strides = [1, 1]} : vector<2x96xf32> to vector<2x32xf32>
    %30 = vector.extract_strided_slice %25 {offsets = [0, 64], sizes = [2, 32], strides = [1, 1]} : vector<2x96xf32> to vector<2x32xf32>
    %31 = arith.mulf %29, %11 : vector<2x32xf32>
    %32 = arith.mulf %28, %27 : vector<2x32xf32>
    %33 = arith.addf %31, %32 : vector<2x32xf32>
    %34 = math.tanh %33 : vector<2x32xf32>
    %35 = arith.mulf %30, %34 : vector<2x32xf32>
    %c14 = arith.constant 14 : index
    %c0_19 = arith.constant 0 : index
    %36 = vector.load %arg0[%c14, %c0_19] : memref<16x4xbf16, #tpu.memory_space<vmem>>, vector<2x4xbf16>
    %cst_20 = arith.constant dense<0.000000e+00> : vector<2x128xf32>
    %37 = tpu.matmul %36, %1, %cst_20 {dimension_numbers = #tpu.dot_dimension_numbers<[1], [0], [0], [1], [0, 0, 1, 1], [], []>} : vector<2x4xbf16>, vector<4x128xbf16>, vector<2x128xf32> -> vector<2x128xf32>
    %38 = arith.addf %37, %9 : vector<2x128xf32>
    %39 = arith.truncf %12 : vector<2x32xf32> to vector<2x32xbf16>
    %cst_21 = arith.constant dense<0.000000e+00> : vector<2x128xf32>
    %40 = tpu.matmul %39, %3, %cst_21 {dimension_numbers = #tpu.dot_dimension_numbers<[1], [0], [0], [1], [0, 0, 1, 1], [], []>} : vector<2x32xbf16>, vector<32x128xbf16>, vector<2x128xf32> -> vector<2x128xf32>
    %41 = arith.addf %38, %40 : vector<2x128xf32>
    %42 = vector.extract_strided_slice %41 {offsets = [0, 0], sizes = [2, 96], strides = [1, 1]} : vector<2x128xf32> to vector<2x96xf32>
    %43 = arith.negf %42 : vector<2x96xf32>
    %44 = math.exp %43 : vector<2x96xf32>
    %cst_22 = arith.constant 1.000000e+00 : f32
    %45 = vector.broadcast %cst_22 : f32 to vector<2x96xf32>
    %46 = arith.addf %45, %44 : vector<2x96xf32>
    %47 = arith.divf %45, %46 : vector<2x96xf32>
    %48 = vector.extract_strided_slice %41 {offsets = [0, 96], sizes = [2, 32], strides = [1, 1]} : vector<2x128xf32> to vector<2x32xf32>
    %49 = math.tanh %48 : vector<2x32xf32>
    %50 = vector.extract_strided_slice %47 {offsets = [0, 0], sizes = [2, 32], strides = [1, 1]} : vector<2x96xf32> to vector<2x32xf32>
    %51 = vector.extract_strided_slice %47 {offsets = [0, 32], sizes = [2, 32], strides = [1, 1]} : vector<2x96xf32> to vector<2x32xf32>
    %52 = vector.extract_strided_slice %47 {offsets = [0, 64], sizes = [2, 32], strides = [1, 1]} : vector<2x96xf32> to vector<2x32xf32>
    %53 = arith.mulf %51, %13 : vector<2x32xf32>
    %54 = arith.mulf %50, %49 : vector<2x32xf32>
    %55 = arith.addf %53, %54 : vector<2x32xf32>
    %56 = math.tanh %55 : vector<2x32xf32>
    %57 = arith.mulf %52, %56 : vector<2x32xf32>
    %c2 = arith.constant 2 : index
    %c0_23 = arith.constant 0 : index
    %58 = vector.load %arg0[%c2, %c0_23] : memref<16x4xbf16, #tpu.memory_space<vmem>>, vector<2x4xbf16>
    %cst_24 = arith.constant dense<0.000000e+00> : vector<2x128xf32>
    %59 = tpu.matmul %58, %0, %cst_24 {dimension_numbers = #tpu.dot_dimension_numbers<[1], [0], [0], [1], [0, 0, 1, 1], [], []>} : vector<2x4xbf16>, vector<4x128xbf16>, vector<2x128xf32> -> vector<2x128xf32>
    %60 = arith.addf %59, %6 : vector<2x128xf32>
    %61 = arith.truncf %35 : vector<2x32xf32> to vector<2x32xbf16>
    %cst_25 = arith.constant dense<0.000000e+00> : vector<2x128xf32>
    %62 = tpu.matmul %61, %2, %cst_25 {dimension_numbers = #tpu.dot_dimension_numbers<[1], [0], [0], [1], [0, 0, 1, 1], [], []>} : vector<2x32xbf16>, vector<32x128xbf16>, vector<2x128xf32> -> vector<2x128xf32>
    %63 = arith.addf %60, %62 : vector<2x128xf32>
    %64 = vector.extract_strided_slice %63 {offsets = [0, 0], sizes = [2, 96], strides = [1, 1]} : vector<2x128xf32> to vector<2x96xf32>
    %65 = arith.negf %64 : vector<2x96xf32>
    %66 = math.exp %65 : vector<2x96xf32>
    %cst_26 = arith.constant 1.000000e+00 : f32
    %67 = vector.broadcast %cst_26 : f32 to vector<2x96xf32>
    %68 = arith.addf %67, %66 : vector<2x96xf32>
    %69 = arith.divf %67, %68 : vector<2x96xf32>
    %70 = vector.extract_strided_slice %63 {offsets = [0, 96], sizes = [2, 32], strides = [1, 1]} : vector<2x128xf32> to vector<2x32xf32>
    %71 = math.tanh %70 : vector<2x32xf32>
    %72 = vector.extract_strided_slice %69 {offsets = [0, 0], sizes = [2, 32], strides = [1, 1]} : vector<2x96xf32> to vector<2x32xf32>
    %73 = vector.extract_strided_slice %69 {offsets = [0, 32], sizes = [2, 32], strides = [1, 1]} : vector<2x96xf32> to vector<2x32xf32>
    %74 = vector.extract_strided_slice %69 {offsets = [0, 64], sizes = [2, 32], strides = [1, 1]} : vector<2x96xf32> to vector<2x32xf32>
    %75 = arith.mulf %73, %33 : vector<2x32xf32>
    %76 = arith.mulf %72, %71 : vector<2x32xf32>
    %77 = arith.addf %75, %76 : vector<2x32xf32>
    %78 = math.tanh %77 : vector<2x32xf32>
    %79 = arith.mulf %74, %78 : vector<2x32xf32>
    %c12 = arith.constant 12 : index
    %c0_27 = arith.constant 0 : index
    %80 = vector.load %arg0[%c12, %c0_27] : memref<16x4xbf16, #tpu.memory_space<vmem>>, vector<2x4xbf16>
    %cst_28 = arith.constant dense<0.000000e+00> : vector<2x128xf32>
    %81 = tpu.matmul %80, %1, %cst_28 {dimension_numbers = #tpu.dot_dimension_numbers<[1], [0], [0], [1], [0, 0, 1, 1], [], []>} : vector<2x4xbf16>, vector<4x128xbf16>, vector<2x128xf32> -> vector<2x128xf32>
    %82 = arith.addf %81, %9 : vector<2x128xf32>
    %83 = arith.truncf %57 : vector<2x32xf32> to vector<2x32xbf16>
    %cst_29 = arith.constant dense<0.000000e+00> : vector<2x128xf32>
    %84 = tpu.matmul %83, %3, %cst_29 {dimension_numbers = #tpu.dot_dimension_numbers<[1], [0], [0], [1], [0, 0, 1, 1], [], []>} : vector<2x32xbf16>, vector<32x128xbf16>, vector<2x128xf32> -> vector<2x128xf32>
    %85 = arith.addf %82, %84 : vector<2x128xf32>
    %86 = vector.extract_strided_slice %85 {offsets = [0, 0], sizes = [2, 96], strides = [1, 1]} : vector<2x128xf32> to vector<2x96xf32>
    %87 = arith.negf %86 : vector<2x96xf32>
    %88 = math.exp %87 : vector<2x96xf32>
    %cst_30 = arith.constant 1.000000e+00 : f32
    %89 = vector.broadcast %cst_30 : f32 to vector<2x96xf32>
    %90 = arith.addf %89, %88 : vector<2x96xf32>
    %91 = arith.divf %89, %90 : vector<2x96xf32>
    %92 = vector.extract_strided_slice %85 {offsets = [0, 96], sizes = [2, 32], strides = [1, 1]} : vector<2x128xf32> to vector<2x32xf32>
    %93 = math.tanh %92 : vector<2x32xf32>
    %94 = vector.extract_strided_slice %91 {offsets = [0, 0], sizes = [2, 32], strides = [1, 1]} : vector<2x96xf32> to vector<2x32xf32>
    %95 = vector.extract_strided_slice %91 {offsets = [0, 32], sizes = [2, 32], strides = [1, 1]} : vector<2x96xf32> to vector<2x32xf32>
    %96 = vector.extract_strided_slice %91 {offsets = [0, 64], sizes = [2, 32], strides = [1, 1]} : vector<2x96xf32> to vector<2x32xf32>
    %97 = arith.mulf %95, %55 : vector<2x32xf32>
    %98 = arith.mulf %94, %93 : vector<2x32xf32>
    %99 = arith.addf %97, %98 : vector<2x32xf32>
    %100 = math.tanh %99 : vector<2x32xf32>
    %101 = arith.mulf %96, %100 : vector<2x32xf32>
    %c4 = arith.constant 4 : index
    %c0_31 = arith.constant 0 : index
    %102 = vector.load %arg0[%c4, %c0_31] : memref<16x4xbf16, #tpu.memory_space<vmem>>, vector<2x4xbf16>
    %cst_32 = arith.constant dense<0.000000e+00> : vector<2x128xf32>
    %103 = tpu.matmul %102, %0, %cst_32 {dimension_numbers = #tpu.dot_dimension_numbers<[1], [0], [0], [1], [0, 0, 1, 1], [], []>} : vector<2x4xbf16>, vector<4x128xbf16>, vector<2x128xf32> -> vector<2x128xf32>
    %104 = arith.addf %103, %6 : vector<2x128xf32>
    %105 = arith.truncf %79 : vector<2x32xf32> to vector<2x32xbf16>
    %cst_33 = arith.constant dense<0.000000e+00> : vector<2x128xf32>
    %106 = tpu.matmul %105, %2, %cst_33 {dimension_numbers = #tpu.dot_dimension_numbers<[1], [0], [0], [1], [0, 0, 1, 1], [], []>} : vector<2x32xbf16>, vector<32x128xbf16>, vector<2x128xf32> -> vector<2x128xf32>
    %107 = arith.addf %104, %106 : vector<2x128xf32>
    %108 = vector.extract_strided_slice %107 {offsets = [0, 0], sizes = [2, 96], strides = [1, 1]} : vector<2x128xf32> to vector<2x96xf32>
    %109 = arith.negf %108 : vector<2x96xf32>
    %110 = math.exp %109 : vector<2x96xf32>
    %cst_34 = arith.constant 1.000000e+00 : f32
    %111 = vector.broadcast %cst_34 : f32 to vector<2x96xf32>
    %112 = arith.addf %111, %110 : vector<2x96xf32>
    %113 = arith.divf %111, %112 : vector<2x96xf32>
    %114 = vector.extract_strided_slice %107 {offsets = [0, 96], sizes = [2, 32], strides = [1, 1]} : vector<2x128xf32> to vector<2x32xf32>
    %115 = math.tanh %114 : vector<2x32xf32>
    %116 = vector.extract_strided_slice %113 {offsets = [0, 0], sizes = [2, 32], strides = [1, 1]} : vector<2x96xf32> to vector<2x32xf32>
    %117 = vector.extract_strided_slice %113 {offsets = [0, 32], sizes = [2, 32], strides = [1, 1]} : vector<2x96xf32> to vector<2x32xf32>
    %118 = vector.extract_strided_slice %113 {offsets = [0, 64], sizes = [2, 32], strides = [1, 1]} : vector<2x96xf32> to vector<2x32xf32>
    %119 = arith.mulf %117, %77 : vector<2x32xf32>
    %120 = arith.mulf %116, %115 : vector<2x32xf32>
    %121 = arith.addf %119, %120 : vector<2x32xf32>
    %122 = math.tanh %121 : vector<2x32xf32>
    %123 = arith.mulf %118, %122 : vector<2x32xf32>
    %c10 = arith.constant 10 : index
    %c0_35 = arith.constant 0 : index
    %124 = vector.load %arg0[%c10, %c0_35] : memref<16x4xbf16, #tpu.memory_space<vmem>>, vector<2x4xbf16>
    %cst_36 = arith.constant dense<0.000000e+00> : vector<2x128xf32>
    %125 = tpu.matmul %124, %1, %cst_36 {dimension_numbers = #tpu.dot_dimension_numbers<[1], [0], [0], [1], [0, 0, 1, 1], [], []>} : vector<2x4xbf16>, vector<4x128xbf16>, vector<2x128xf32> -> vector<2x128xf32>
    %126 = arith.addf %125, %9 : vector<2x128xf32>
    %127 = arith.truncf %101 : vector<2x32xf32> to vector<2x32xbf16>
    %cst_37 = arith.constant dense<0.000000e+00> : vector<2x128xf32>
    %128 = tpu.matmul %127, %3, %cst_37 {dimension_numbers = #tpu.dot_dimension_numbers<[1], [0], [0], [1], [0, 0, 1, 1], [], []>} : vector<2x32xbf16>, vector<32x128xbf16>, vector<2x128xf32> -> vector<2x128xf32>
    %129 = arith.addf %126, %128 : vector<2x128xf32>
    %130 = vector.extract_strided_slice %129 {offsets = [0, 0], sizes = [2, 96], strides = [1, 1]} : vector<2x128xf32> to vector<2x96xf32>
    %131 = arith.negf %130 : vector<2x96xf32>
    %132 = math.exp %131 : vector<2x96xf32>
    %cst_38 = arith.constant 1.000000e+00 : f32
    %133 = vector.broadcast %cst_38 : f32 to vector<2x96xf32>
    %134 = arith.addf %133, %132 : vector<2x96xf32>
    %135 = arith.divf %133, %134 : vector<2x96xf32>
    %136 = vector.extract_strided_slice %129 {offsets = [0, 96], sizes = [2, 32], strides = [1, 1]} : vector<2x128xf32> to vector<2x32xf32>
    %137 = math.tanh %136 : vector<2x32xf32>
    %138 = vector.extract_strided_slice %135 {offsets = [0, 0], sizes = [2, 32], strides = [1, 1]} : vector<2x96xf32> to vector<2x32xf32>
    %139 = vector.extract_strided_slice %135 {offsets = [0, 32], sizes = [2, 32], strides = [1, 1]} : vector<2x96xf32> to vector<2x32xf32>
    %140 = vector.extract_strided_slice %135 {offsets = [0, 64], sizes = [2, 32], strides = [1, 1]} : vector<2x96xf32> to vector<2x32xf32>
    %141 = arith.mulf %139, %99 : vector<2x32xf32>
    %142 = arith.mulf %138, %137 : vector<2x32xf32>
    %143 = arith.addf %141, %142 : vector<2x32xf32>
    %144 = math.tanh %143 : vector<2x32xf32>
    %145 = arith.mulf %140, %144 : vector<2x32xf32>
    %c6 = arith.constant 6 : index
    %c0_39 = arith.constant 0 : index
    %146 = vector.load %arg0[%c6, %c0_39] : memref<16x4xbf16, #tpu.memory_space<vmem>>, vector<2x4xbf16>
    %cst_40 = arith.constant dense<0.000000e+00> : vector<2x128xf32>
    %147 = tpu.matmul %146, %0, %cst_40 {dimension_numbers = #tpu.dot_dimension_numbers<[1], [0], [0], [1], [0, 0, 1, 1], [], []>} : vector<2x4xbf16>, vector<4x128xbf16>, vector<2x128xf32> -> vector<2x128xf32>
    %148 = arith.addf %147, %6 : vector<2x128xf32>
    %149 = arith.truncf %123 : vector<2x32xf32> to vector<2x32xbf16>
    %cst_41 = arith.constant dense<0.000000e+00> : vector<2x128xf32>
    %150 = tpu.matmul %149, %2, %cst_41 {dimension_numbers = #tpu.dot_dimension_numbers<[1], [0], [0], [1], [0, 0, 1, 1], [], []>} : vector<2x32xbf16>, vector<32x128xbf16>, vector<2x128xf32> -> vector<2x128xf32>
    %151 = arith.addf %148, %150 : vector<2x128xf32>
    %152 = vector.extract_strided_slice %151 {offsets = [0, 0], sizes = [2, 96], strides = [1, 1]} : vector<2x128xf32> to vector<2x96xf32>
    %153 = arith.negf %152 : vector<2x96xf32>
    %154 = math.exp %153 : vector<2x96xf32>
    %cst_42 = arith.constant 1.000000e+00 : f32
    %155 = vector.broadcast %cst_42 : f32 to vector<2x96xf32>
    %156 = arith.addf %155, %154 : vector<2x96xf32>
    %157 = arith.divf %155, %156 : vector<2x96xf32>
    %158 = vector.extract_strided_slice %151 {offsets = [0, 96], sizes = [2, 32], strides = [1, 1]} : vector<2x128xf32> to vector<2x32xf32>
    %159 = math.tanh %158 : vector<2x32xf32>
    %160 = vector.extract_strided_slice %157 {offsets = [0, 0], sizes = [2, 32], strides = [1, 1]} : vector<2x96xf32> to vector<2x32xf32>
    %161 = vector.extract_strided_slice %157 {offsets = [0, 32], sizes = [2, 32], strides = [1, 1]} : vector<2x96xf32> to vector<2x32xf32>
    %162 = vector.extract_strided_slice %157 {offsets = [0, 64], sizes = [2, 32], strides = [1, 1]} : vector<2x96xf32> to vector<2x32xf32>
    %163 = arith.mulf %161, %121 : vector<2x32xf32>
    %164 = arith.mulf %160, %159 : vector<2x32xf32>
    %165 = arith.addf %163, %164 : vector<2x32xf32>
    %166 = math.tanh %165 : vector<2x32xf32>
    %167 = arith.mulf %162, %166 : vector<2x32xf32>
    %c8 = arith.constant 8 : index
    %c0_43 = arith.constant 0 : index
    %168 = vector.load %arg0[%c8, %c0_43] : memref<16x4xbf16, #tpu.memory_space<vmem>>, vector<2x4xbf16>
    %cst_44 = arith.constant dense<0.000000e+00> : vector<2x128xf32>
    %169 = tpu.matmul %168, %1, %cst_44 {dimension_numbers = #tpu.dot_dimension_numbers<[1], [0], [0], [1], [0, 0, 1, 1], [], []>} : vector<2x4xbf16>, vector<4x128xbf16>, vector<2x128xf32> -> vector<2x128xf32>
    %170 = arith.addf %169, %9 : vector<2x128xf32>
    %171 = arith.truncf %145 : vector<2x32xf32> to vector<2x32xbf16>
    %cst_45 = arith.constant dense<0.000000e+00> : vector<2x128xf32>
    %172 = tpu.matmul %171, %3, %cst_45 {dimension_numbers = #tpu.dot_dimension_numbers<[1], [0], [0], [1], [0, 0, 1, 1], [], []>} : vector<2x32xbf16>, vector<32x128xbf16>, vector<2x128xf32> -> vector<2x128xf32>
    %173 = arith.addf %170, %172 : vector<2x128xf32>
    %174 = vector.extract_strided_slice %173 {offsets = [0, 0], sizes = [2, 96], strides = [1, 1]} : vector<2x128xf32> to vector<2x96xf32>
    %175 = arith.negf %174 : vector<2x96xf32>
    %176 = math.exp %175 : vector<2x96xf32>
    %cst_46 = arith.constant 1.000000e+00 : f32
    %177 = vector.broadcast %cst_46 : f32 to vector<2x96xf32>
    %178 = arith.addf %177, %176 : vector<2x96xf32>
    %179 = arith.divf %177, %178 : vector<2x96xf32>
    %180 = vector.extract_strided_slice %173 {offsets = [0, 96], sizes = [2, 32], strides = [1, 1]} : vector<2x128xf32> to vector<2x32xf32>
    %181 = math.tanh %180 : vector<2x32xf32>
    %182 = vector.extract_strided_slice %179 {offsets = [0, 0], sizes = [2, 32], strides = [1, 1]} : vector<2x96xf32> to vector<2x32xf32>
    %183 = vector.extract_strided_slice %179 {offsets = [0, 32], sizes = [2, 32], strides = [1, 1]} : vector<2x96xf32> to vector<2x32xf32>
    %184 = vector.extract_strided_slice %179 {offsets = [0, 64], sizes = [2, 32], strides = [1, 1]} : vector<2x96xf32> to vector<2x32xf32>
    %185 = arith.mulf %183, %143 : vector<2x32xf32>
    %186 = arith.mulf %182, %181 : vector<2x32xf32>
    %187 = arith.addf %185, %186 : vector<2x32xf32>
    %188 = math.tanh %187 : vector<2x32xf32>
    %189 = arith.mulf %184, %188 : vector<2x32xf32>
    %c8_47 = arith.constant 8 : index
    %c0_48 = arith.constant 0 : index
    %190 = vector.load %arg0[%c8_47, %c0_48] : memref<16x4xbf16, #tpu.memory_space<vmem>>, vector<2x4xbf16>
    %cst_49 = arith.constant dense<0.000000e+00> : vector<2x128xf32>
    %191 = tpu.matmul %190, %0, %cst_49 {dimension_numbers = #tpu.dot_dimension_numbers<[1], [0], [0], [1], [0, 0, 1, 1], [], []>} : vector<2x4xbf16>, vector<4x128xbf16>, vector<2x128xf32> -> vector<2x128xf32>
    %192 = arith.addf %191, %6 : vector<2x128xf32>
    %193 = arith.truncf %167 : vector<2x32xf32> to vector<2x32xbf16>
    %cst_50 = arith.constant dense<0.000000e+00> : vector<2x128xf32>
    %194 = tpu.matmul %193, %2, %cst_50 {dimension_numbers = #tpu.dot_dimension_numbers<[1], [0], [0], [1], [0, 0, 1, 1], [], []>} : vector<2x32xbf16>, vector<32x128xbf16>, vector<2x128xf32> -> vector<2x128xf32>
    %195 = arith.addf %192, %194 : vector<2x128xf32>
    %196 = vector.extract_strided_slice %195 {offsets = [0, 0], sizes = [2, 96], strides = [1, 1]} : vector<2x128xf32> to vector<2x96xf32>
    %197 = arith.negf %196 : vector<2x96xf32>
    %198 = math.exp %197 : vector<2x96xf32>
    %cst_51 = arith.constant 1.000000e+00 : f32
    %199 = vector.broadcast %cst_51 : f32 to vector<2x96xf32>
    %200 = arith.addf %199, %198 : vector<2x96xf32>
    %201 = arith.divf %199, %200 : vector<2x96xf32>
    %202 = vector.extract_strided_slice %195 {offsets = [0, 96], sizes = [2, 32], strides = [1, 1]} : vector<2x128xf32> to vector<2x32xf32>
    %203 = math.tanh %202 : vector<2x32xf32>
    %204 = vector.extract_strided_slice %201 {offsets = [0, 0], sizes = [2, 32], strides = [1, 1]} : vector<2x96xf32> to vector<2x32xf32>
    %205 = vector.extract_strided_slice %201 {offsets = [0, 32], sizes = [2, 32], strides = [1, 1]} : vector<2x96xf32> to vector<2x32xf32>
    %206 = vector.extract_strided_slice %201 {offsets = [0, 64], sizes = [2, 32], strides = [1, 1]} : vector<2x96xf32> to vector<2x32xf32>
    %207 = arith.mulf %205, %165 : vector<2x32xf32>
    %208 = arith.mulf %204, %203 : vector<2x32xf32>
    %209 = arith.addf %207, %208 : vector<2x32xf32>
    %210 = math.tanh %209 : vector<2x32xf32>
    %211 = arith.mulf %206, %210 : vector<2x32xf32>
    %c6_52 = arith.constant 6 : index
    %c0_53 = arith.constant 0 : index
    %212 = vector.load %arg0[%c6_52, %c0_53] : memref<16x4xbf16, #tpu.memory_space<vmem>>, vector<2x4xbf16>
    %cst_54 = arith.constant dense<0.000000e+00> : vector<2x128xf32>
    %213 = tpu.matmul %212, %1, %cst_54 {dimension_numbers = #tpu.dot_dimension_numbers<[1], [0], [0], [1], [0, 0, 1, 1], [], []>} : vector<2x4xbf16>, vector<4x128xbf16>, vector<2x128xf32> -> vector<2x128xf32>
    %214 = arith.addf %213, %9 : vector<2x128xf32>
    %215 = arith.truncf %189 : vector<2x32xf32> to vector<2x32xbf16>
    %cst_55 = arith.constant dense<0.000000e+00> : vector<2x128xf32>
    %216 = tpu.matmul %215, %3, %cst_55 {dimension_numbers = #tpu.dot_dimension_numbers<[1], [0], [0], [1], [0, 0, 1, 1], [], []>} : vector<2x32xbf16>, vector<32x128xbf16>, vector<2x128xf32> -> vector<2x128xf32>
    %217 = arith.addf %214, %216 : vector<2x128xf32>
    %218 = vector.extract_strided_slice %217 {offsets = [0, 0], sizes = [2, 96], strides = [1, 1]} : vector<2x128xf32> to vector<2x96xf32>
    %219 = arith.negf %218 : vector<2x96xf32>
    %220 = math.exp %219 : vector<2x96xf32>
    %cst_56 = arith.constant 1.000000e+00 : f32
    %221 = vector.broadcast %cst_56 : f32 to vector<2x96xf32>
    %222 = arith.addf %221, %220 : vector<2x96xf32>
    %223 = arith.divf %221, %222 : vector<2x96xf32>
    %224 = vector.extract_strided_slice %217 {offsets = [0, 96], sizes = [2, 32], strides = [1, 1]} : vector<2x128xf32> to vector<2x32xf32>
    %225 = math.tanh %224 : vector<2x32xf32>
    %226 = vector.extract_strided_slice %223 {offsets = [0, 0], sizes = [2, 32], strides = [1, 1]} : vector<2x96xf32> to vector<2x32xf32>
    %227 = vector.extract_strided_slice %223 {offsets = [0, 32], sizes = [2, 32], strides = [1, 1]} : vector<2x96xf32> to vector<2x32xf32>
    %228 = vector.extract_strided_slice %223 {offsets = [0, 64], sizes = [2, 32], strides = [1, 1]} : vector<2x96xf32> to vector<2x32xf32>
    %229 = arith.mulf %227, %187 : vector<2x32xf32>
    %230 = arith.mulf %226, %225 : vector<2x32xf32>
    %231 = arith.addf %229, %230 : vector<2x32xf32>
    %232 = math.tanh %231 : vector<2x32xf32>
    %233 = arith.mulf %228, %232 : vector<2x32xf32>
    %c10_57 = arith.constant 10 : index
    %c0_58 = arith.constant 0 : index
    %234 = vector.load %arg0[%c10_57, %c0_58] : memref<16x4xbf16, #tpu.memory_space<vmem>>, vector<2x4xbf16>
    %cst_59 = arith.constant dense<0.000000e+00> : vector<2x128xf32>
    %235 = tpu.matmul %234, %0, %cst_59 {dimension_numbers = #tpu.dot_dimension_numbers<[1], [0], [0], [1], [0, 0, 1, 1], [], []>} : vector<2x4xbf16>, vector<4x128xbf16>, vector<2x128xf32> -> vector<2x128xf32>
    %236 = arith.addf %235, %6 : vector<2x128xf32>
    %237 = arith.truncf %211 : vector<2x32xf32> to vector<2x32xbf16>
    %cst_60 = arith.constant dense<0.000000e+00> : vector<2x128xf32>
    %238 = tpu.matmul %237, %2, %cst_60 {dimension_numbers = #tpu.dot_dimension_numbers<[1], [0], [0], [1], [0, 0, 1, 1], [], []>} : vector<2x32xbf16>, vector<32x128xbf16>, vector<2x128xf32> -> vector<2x128xf32>
    %239 = arith.addf %236, %238 : vector<2x128xf32>
    %240 = vector.extract_strided_slice %239 {offsets = [0, 0], sizes = [2, 96], strides = [1, 1]} : vector<2x128xf32> to vector<2x96xf32>
    %241 = arith.negf %240 : vector<2x96xf32>
    %242 = math.exp %241 : vector<2x96xf32>
    %cst_61 = arith.constant 1.000000e+00 : f32
    %243 = vector.broadcast %cst_61 : f32 to vector<2x96xf32>
    %244 = arith.addf %243, %242 : vector<2x96xf32>
    %245 = arith.divf %243, %244 : vector<2x96xf32>
    %246 = vector.extract_strided_slice %239 {offsets = [0, 96], sizes = [2, 32], strides = [1, 1]} : vector<2x128xf32> to vector<2x32xf32>
    %247 = math.tanh %246 : vector<2x32xf32>
    %248 = vector.extract_strided_slice %245 {offsets = [0, 0], sizes = [2, 32], strides = [1, 1]} : vector<2x96xf32> to vector<2x32xf32>
    %249 = vector.extract_strided_slice %245 {offsets = [0, 32], sizes = [2, 32], strides = [1, 1]} : vector<2x96xf32> to vector<2x32xf32>
    %250 = vector.extract_strided_slice %245 {offsets = [0, 64], sizes = [2, 32], strides = [1, 1]} : vector<2x96xf32> to vector<2x32xf32>
    %251 = arith.mulf %249, %209 : vector<2x32xf32>
    %252 = arith.mulf %248, %247 : vector<2x32xf32>
    %253 = arith.addf %251, %252 : vector<2x32xf32>
    %254 = math.tanh %253 : vector<2x32xf32>
    %255 = arith.mulf %250, %254 : vector<2x32xf32>
    %c4_62 = arith.constant 4 : index
    %c0_63 = arith.constant 0 : index
    %256 = vector.load %arg0[%c4_62, %c0_63] : memref<16x4xbf16, #tpu.memory_space<vmem>>, vector<2x4xbf16>
    %cst_64 = arith.constant dense<0.000000e+00> : vector<2x128xf32>
    %257 = tpu.matmul %256, %1, %cst_64 {dimension_numbers = #tpu.dot_dimension_numbers<[1], [0], [0], [1], [0, 0, 1, 1], [], []>} : vector<2x4xbf16>, vector<4x128xbf16>, vector<2x128xf32> -> vector<2x128xf32>
    %258 = arith.addf %257, %9 : vector<2x128xf32>
    %259 = arith.truncf %233 : vector<2x32xf32> to vector<2x32xbf16>
    %cst_65 = arith.constant dense<0.000000e+00> : vector<2x128xf32>
    %260 = tpu.matmul %259, %3, %cst_65 {dimension_numbers = #tpu.dot_dimension_numbers<[1], [0], [0], [1], [0, 0, 1, 1], [], []>} : vector<2x32xbf16>, vector<32x128xbf16>, vector<2x128xf32> -> vector<2x128xf32>
    %261 = arith.addf %258, %260 : vector<2x128xf32>
    %262 = vector.extract_strided_slice %261 {offsets = [0, 0], sizes = [2, 96], strides = [1, 1]} : vector<2x128xf32> to vector<2x96xf32>
    %263 = arith.negf %262 : vector<2x96xf32>
    %264 = math.exp %263 : vector<2x96xf32>
    %cst_66 = arith.constant 1.000000e+00 : f32
    %265 = vector.broadcast %cst_66 : f32 to vector<2x96xf32>
    %266 = arith.addf %265, %264 : vector<2x96xf32>
    %267 = arith.divf %265, %266 : vector<2x96xf32>
    %268 = vector.extract_strided_slice %261 {offsets = [0, 96], sizes = [2, 32], strides = [1, 1]} : vector<2x128xf32> to vector<2x32xf32>
    %269 = math.tanh %268 : vector<2x32xf32>
    %270 = vector.extract_strided_slice %267 {offsets = [0, 0], sizes = [2, 32], strides = [1, 1]} : vector<2x96xf32> to vector<2x32xf32>
    %271 = vector.extract_strided_slice %267 {offsets = [0, 32], sizes = [2, 32], strides = [1, 1]} : vector<2x96xf32> to vector<2x32xf32>
    %272 = vector.extract_strided_slice %267 {offsets = [0, 64], sizes = [2, 32], strides = [1, 1]} : vector<2x96xf32> to vector<2x32xf32>
    %273 = arith.mulf %271, %231 : vector<2x32xf32>
    %274 = arith.mulf %270, %269 : vector<2x32xf32>
    %275 = arith.addf %273, %274 : vector<2x32xf32>
    %276 = math.tanh %275 : vector<2x32xf32>
    %277 = arith.mulf %272, %276 : vector<2x32xf32>
    %c12_67 = arith.constant 12 : index
    %c0_68 = arith.constant 0 : index
    %278 = vector.load %arg0[%c12_67, %c0_68] : memref<16x4xbf16, #tpu.memory_space<vmem>>, vector<2x4xbf16>
    %cst_69 = arith.constant dense<0.000000e+00> : vector<2x128xf32>
    %279 = tpu.matmul %278, %0, %cst_69 {dimension_numbers = #tpu.dot_dimension_numbers<[1], [0], [0], [1], [0, 0, 1, 1], [], []>} : vector<2x4xbf16>, vector<4x128xbf16>, vector<2x128xf32> -> vector<2x128xf32>
    %280 = arith.addf %279, %6 : vector<2x128xf32>
    %281 = arith.truncf %255 : vector<2x32xf32> to vector<2x32xbf16>
    %cst_70 = arith.constant dense<0.000000e+00> : vector<2x128xf32>
    %282 = tpu.matmul %281, %2, %cst_70 {dimension_numbers = #tpu.dot_dimension_numbers<[1], [0], [0], [1], [0, 0, 1, 1], [], []>} : vector<2x32xbf16>, vector<32x128xbf16>, vector<2x128xf32> -> vector<2x128xf32>
    %283 = arith.addf %280, %282 : vector<2x128xf32>
    %284 = vector.extract_strided_slice %283 {offsets = [0, 0], sizes = [2, 96], strides = [1, 1]} : vector<2x128xf32> to vector<2x96xf32>
    %285 = arith.negf %284 : vector<2x96xf32>
    %286 = math.exp %285 : vector<2x96xf32>
    %cst_71 = arith.constant 1.000000e+00 : f32
    %287 = vector.broadcast %cst_71 : f32 to vector<2x96xf32>
    %288 = arith.addf %287, %286 : vector<2x96xf32>
    %289 = arith.divf %287, %288 : vector<2x96xf32>
    %290 = vector.extract_strided_slice %283 {offsets = [0, 96], sizes = [2, 32], strides = [1, 1]} : vector<2x128xf32> to vector<2x32xf32>
    %291 = math.tanh %290 : vector<2x32xf32>
    %292 = vector.extract_strided_slice %289 {offsets = [0, 0], sizes = [2, 32], strides = [1, 1]} : vector<2x96xf32> to vector<2x32xf32>
    %293 = vector.extract_strided_slice %289 {offsets = [0, 32], sizes = [2, 32], strides = [1, 1]} : vector<2x96xf32> to vector<2x32xf32>
    %294 = vector.extract_strided_slice %289 {offsets = [0, 64], sizes = [2, 32], strides = [1, 1]} : vector<2x96xf32> to vector<2x32xf32>
    %295 = arith.mulf %293, %253 : vector<2x32xf32>
    %296 = arith.mulf %292, %291 : vector<2x32xf32>
    %297 = arith.addf %295, %296 : vector<2x32xf32>
    %298 = math.tanh %297 : vector<2x32xf32>
    %299 = arith.mulf %294, %298 : vector<2x32xf32>
    %c2_72 = arith.constant 2 : index
    %c0_73 = arith.constant 0 : index
    %300 = vector.load %arg0[%c2_72, %c0_73] : memref<16x4xbf16, #tpu.memory_space<vmem>>, vector<2x4xbf16>
    %cst_74 = arith.constant dense<0.000000e+00> : vector<2x128xf32>
    %301 = tpu.matmul %300, %1, %cst_74 {dimension_numbers = #tpu.dot_dimension_numbers<[1], [0], [0], [1], [0, 0, 1, 1], [], []>} : vector<2x4xbf16>, vector<4x128xbf16>, vector<2x128xf32> -> vector<2x128xf32>
    %302 = arith.addf %301, %9 : vector<2x128xf32>
    %303 = arith.truncf %277 : vector<2x32xf32> to vector<2x32xbf16>
    %cst_75 = arith.constant dense<0.000000e+00> : vector<2x128xf32>
    %304 = tpu.matmul %303, %3, %cst_75 {dimension_numbers = #tpu.dot_dimension_numbers<[1], [0], [0], [1], [0, 0, 1, 1], [], []>} : vector<2x32xbf16>, vector<32x128xbf16>, vector<2x128xf32> -> vector<2x128xf32>
    %305 = arith.addf %302, %304 : vector<2x128xf32>
    %306 = vector.extract_strided_slice %305 {offsets = [0, 0], sizes = [2, 96], strides = [1, 1]} : vector<2x128xf32> to vector<2x96xf32>
    %307 = arith.negf %306 : vector<2x96xf32>
    %308 = math.exp %307 : vector<2x96xf32>
    %cst_76 = arith.constant 1.000000e+00 : f32
    %309 = vector.broadcast %cst_76 : f32 to vector<2x96xf32>
    %310 = arith.addf %309, %308 : vector<2x96xf32>
    %311 = arith.divf %309, %310 : vector<2x96xf32>
    %312 = vector.extract_strided_slice %305 {offsets = [0, 96], sizes = [2, 32], strides = [1, 1]} : vector<2x128xf32> to vector<2x32xf32>
    %313 = math.tanh %312 : vector<2x32xf32>
    %314 = vector.extract_strided_slice %311 {offsets = [0, 0], sizes = [2, 32], strides = [1, 1]} : vector<2x96xf32> to vector<2x32xf32>
    %315 = vector.extract_strided_slice %311 {offsets = [0, 32], sizes = [2, 32], strides = [1, 1]} : vector<2x96xf32> to vector<2x32xf32>
    %316 = vector.extract_strided_slice %311 {offsets = [0, 64], sizes = [2, 32], strides = [1, 1]} : vector<2x96xf32> to vector<2x32xf32>
    %317 = arith.mulf %315, %275 : vector<2x32xf32>
    %318 = arith.mulf %314, %313 : vector<2x32xf32>
    %319 = arith.addf %317, %318 : vector<2x32xf32>
    %320 = math.tanh %319 : vector<2x32xf32>
    %321 = arith.mulf %316, %320 : vector<2x32xf32>
    %c14_77 = arith.constant 14 : index
    %c0_78 = arith.constant 0 : index
    %322 = vector.load %arg0[%c14_77, %c0_78] : memref<16x4xbf16, #tpu.memory_space<vmem>>, vector<2x4xbf16>
    %cst_79 = arith.constant dense<0.000000e+00> : vector<2x128xf32>
    %323 = tpu.matmul %322, %0, %cst_79 {dimension_numbers = #tpu.dot_dimension_numbers<[1], [0], [0], [1], [0, 0, 1, 1], [], []>} : vector<2x4xbf16>, vector<4x128xbf16>, vector<2x128xf32> -> vector<2x128xf32>
    %324 = arith.addf %323, %6 : vector<2x128xf32>
    %325 = arith.truncf %299 : vector<2x32xf32> to vector<2x32xbf16>
    %cst_80 = arith.constant dense<0.000000e+00> : vector<2x128xf32>
    %326 = tpu.matmul %325, %2, %cst_80 {dimension_numbers = #tpu.dot_dimension_numbers<[1], [0], [0], [1], [0, 0, 1, 1], [], []>} : vector<2x32xbf16>, vector<32x128xbf16>, vector<2x128xf32> -> vector<2x128xf32>
    %327 = arith.addf %324, %326 : vector<2x128xf32>
    %328 = vector.extract_strided_slice %327 {offsets = [0, 0], sizes = [2, 96], strides = [1, 1]} : vector<2x128xf32> to vector<2x96xf32>
    %329 = arith.negf %328 : vector<2x96xf32>
    %330 = math.exp %329 : vector<2x96xf32>
    %cst_81 = arith.constant 1.000000e+00 : f32
    %331 = vector.broadcast %cst_81 : f32 to vector<2x96xf32>
    %332 = arith.addf %331, %330 : vector<2x96xf32>
    %333 = arith.divf %331, %332 : vector<2x96xf32>
    %334 = vector.extract_strided_slice %327 {offsets = [0, 96], sizes = [2, 32], strides = [1, 1]} : vector<2x128xf32> to vector<2x32xf32>
    %335 = math.tanh %334 : vector<2x32xf32>
    %336 = vector.extract_strided_slice %333 {offsets = [0, 0], sizes = [2, 32], strides = [1, 1]} : vector<2x96xf32> to vector<2x32xf32>
    %337 = vector.extract_strided_slice %333 {offsets = [0, 32], sizes = [2, 32], strides = [1, 1]} : vector<2x96xf32> to vector<2x32xf32>
    %338 = vector.extract_strided_slice %333 {offsets = [0, 64], sizes = [2, 32], strides = [1, 1]} : vector<2x96xf32> to vector<2x32xf32>
    %339 = arith.mulf %337, %297 : vector<2x32xf32>
    %340 = arith.mulf %336, %335 : vector<2x32xf32>
    %341 = arith.addf %339, %340 : vector<2x32xf32>
    %342 = math.tanh %341 : vector<2x32xf32>
    %343 = arith.mulf %338, %342 : vector<2x32xf32>
    %c0_82 = arith.constant 0 : index
    %c0_83 = arith.constant 0 : index
    %344 = vector.load %arg0[%c0_82, %c0_83] : memref<16x4xbf16, #tpu.memory_space<vmem>>, vector<2x4xbf16>
    %cst_84 = arith.constant dense<0.000000e+00> : vector<2x128xf32>
    %345 = tpu.matmul %344, %1, %cst_84 {dimension_numbers = #tpu.dot_dimension_numbers<[1], [0], [0], [1], [0, 0, 1, 1], [], []>} : vector<2x4xbf16>, vector<4x128xbf16>, vector<2x128xf32> -> vector<2x128xf32>
    %346 = arith.addf %345, %9 : vector<2x128xf32>
    %347 = arith.truncf %321 : vector<2x32xf32> to vector<2x32xbf16>
    %cst_85 = arith.constant dense<0.000000e+00> : vector<2x128xf32>
    %348 = tpu.matmul %347, %3, %cst_85 {dimension_numbers = #tpu.dot_dimension_numbers<[1], [0], [0], [1], [0, 0, 1, 1], [], []>} : vector<2x32xbf16>, vector<32x128xbf16>, vector<2x128xf32> -> vector<2x128xf32>
    %349 = arith.addf %346, %348 : vector<2x128xf32>
    %350 = vector.extract_strided_slice %349 {offsets = [0, 0], sizes = [2, 96], strides = [1, 1]} : vector<2x128xf32> to vector<2x96xf32>
    %351 = arith.negf %350 : vector<2x96xf32>
    %352 = math.exp %351 : vector<2x96xf32>
    %cst_86 = arith.constant 1.000000e+00 : f32
    %353 = vector.broadcast %cst_86 : f32 to vector<2x96xf32>
    %354 = arith.addf %353, %352 : vector<2x96xf32>
    %355 = arith.divf %353, %354 : vector<2x96xf32>
    %356 = vector.extract_strided_slice %349 {offsets = [0, 96], sizes = [2, 32], strides = [1, 1]} : vector<2x128xf32> to vector<2x32xf32>
    %357 = math.tanh %356 : vector<2x32xf32>
    %358 = vector.extract_strided_slice %355 {offsets = [0, 0], sizes = [2, 32], strides = [1, 1]} : vector<2x96xf32> to vector<2x32xf32>
    %359 = vector.extract_strided_slice %355 {offsets = [0, 32], sizes = [2, 32], strides = [1, 1]} : vector<2x96xf32> to vector<2x32xf32>
    %360 = vector.extract_strided_slice %355 {offsets = [0, 64], sizes = [2, 32], strides = [1, 1]} : vector<2x96xf32> to vector<2x32xf32>
    %361 = arith.mulf %359, %319 : vector<2x32xf32>
    %362 = arith.mulf %358, %357 : vector<2x32xf32>
    %363 = arith.addf %361, %362 : vector<2x32xf32>
    %364 = math.tanh %363 : vector<2x32xf32>
    %365 = arith.mulf %360, %364 : vector<2x32xf32>
    %366 = arith.truncf %343 : vector<2x32xf32> to vector<2x32xbf16>
    %c0_87 = arith.constant 0 : index
    %c0_88 = arith.constant 0 : index
    %367 = vector.load %arg7[%c0_87, %c0_88] : memref<32x2xbf16, #tpu.memory_space<vmem>>, vector<32x2xbf16>
    %cst_89 = arith.constant dense<0.000000e+00> : vector<2x2xf32>
    %368 = tpu.matmul %366, %367, %cst_89 {dimension_numbers = #tpu.dot_dimension_numbers<[1], [0], [0], [1], [0, 0, 1, 1], [], []>} : vector<2x32xbf16>, vector<32x2xbf16>, vector<2x2xf32> -> vector<2x2xf32>
    %369 = arith.truncf %365 : vector<2x32xf32> to vector<2x32xbf16>
    %c0_90 = arith.constant 0 : index
    %c0_91 = arith.constant 0 : index
    %370 = vector.load %arg8[%c0_90, %c0_91] : memref<32x2xbf16, #tpu.memory_space<vmem>>, vector<32x2xbf16>
    %cst_92 = arith.constant dense<0.000000e+00> : vector<2x2xf32>
    %371 = tpu.matmul %369, %370, %cst_92 {dimension_numbers = #tpu.dot_dimension_numbers<[1], [0], [0], [1], [0, 0, 1, 1], [], []>} : vector<2x32xbf16>, vector<32x2xbf16>, vector<2x2xf32> -> vector<2x2xf32>
    %372 = arith.addf %368, %371 : vector<2x2xf32>
    %c0_93 = arith.constant 0 : index
    %c0_94 = arith.constant 0 : index
    %373 = vector.load %arg9[%c0_93, %c0_94] : memref<1x2xf32, #tpu.memory_space<vmem>>, vector<1x2xf32>
    %374 = vector.broadcast %373 : vector<1x2xf32> to vector<2x2xf32>
    %375 = arith.addf %372, %374 : vector<2x2xf32>
    %c0_95 = arith.constant 0 : index
    %c0_96 = arith.constant 0 : index
    %376 = vector.load %arg10[%c0_95, %c0_96] : memref<2x2xf32, #tpu.memory_space<vmem>>, vector<2x2xf32>
    tpu.vector_store %arg10[%c0_95, %c0_96], %375 {strides = array<i32>} : memref<2x2xf32, #tpu.memory_space<vmem>>, vector<2x2xf32>,
    return
  }
}

</mosaic_0001>

<llo_original>
// kernel: lstm_forward.1
$region0: #{lstm_forward.1}
  #allocation0 [shape = 'u32[]', space=smem, size = 0x4, offset = 0x4, fixed_abs, tag = 'smem constant byte address 0x4 - core index']
  #allocation1 [shape = 'u32[72,128]{1,0:T(1,128)}', space=vmem, size = 0x9000, scoped, tag = 'internal scratch']
  %s0 = inlined_call_operand.vmem [shape: bf16[16,4], index: 0, kind: input, shape index: {}]
  %s1 = inlined_call_operand.vmem [shape: bf16[4,128], index: 1, kind: input, shape index: {}]
  %s2 = inlined_call_operand.vmem [shape: bf16[4,128], index: 2, kind: input, shape index: {}]
  %s3 = inlined_call_operand.vmem [shape: bf16[32,128], index: 3, kind: input, shape index: {}]
  %s4 = inlined_call_operand.vmem [shape: bf16[32,128], index: 4, kind: input, shape index: {}]
  %s5 = inlined_call_operand.vmem [shape: f32[1,128], index: 5, kind: input, shape index: {}]
  %s6 = inlined_call_operand.vmem [shape: f32[1,128], index: 6, kind: input, shape index: {}]
  %s7 = inlined_call_operand.vmem [shape: bf16[32,2], index: 7, kind: input, shape index: {}]
  %s8 = inlined_call_operand.vmem [shape: bf16[32,2], index: 8, kind: input, shape index: {}]
  %s9 = inlined_call_operand.vmem [shape: f32[1,2], index: 9, kind: input, shape index: {}]
  %s10 = inlined_call_operand.hbm [shape: f32[2,2], index: 10, kind: output, shape index: {}]
  %s11 = sld [smem:[#allocation0]]
  $region50: #{lstm_forward.1} parent=0
    _
  %s13 = ssub.s32 1, %s11
  %s14 = scalar_select 0, %s13, %s11
  $region1: #{lstm_forward.1} parent=0
    #allocation2 [shape = 'u8[1024]{0}', space=vmem, size = 0x400, scoped, tag = 'output window, operand 0, single buffered']
    #allocation3 [shape = 's32[1]{0}', space=sflag, size = 0x4, scoped, tag = 'scoped memory for lstm_forward.1']
    %15 = vsyncpa [#allocation3], 0
    // Predicated region
    $region2: #{lstm_forward.1} parent=1 // pred_check
      _
    $region3: #{lstm_forward.1} parent=1 // pred_check_branch
      %17 = sbr.rel (0) target = $region5
    $region4: #{lstm_forward.1} parent=1 // pred_region
      _
    $region5: #{lstm_forward.1} parent=1 // pred_fallthru
      _
    // Predicated region
    $region6: #{lstm_forward.1} parent=1 // pred_check
      _
    $region7: #{lstm_forward.1} parent=1 // pred_check_branch
      %19 = sbr.rel (0) target = $region9
    $region8: #{lstm_forward.1} parent=1 // pred_region
      _
    $region9: #{lstm_forward.1} parent=1 // pred_fallthru
      _
    // Predicated region
    $region10: #{lstm_forward.1} parent=1 // pred_check
      _
    $region11: #{lstm_forward.1} parent=1 // pred_check_branch
      %21 = sbr.rel (0) target = $region13
    $region12: #{lstm_forward.1} parent=1 // pred_region
      _
    $region13: #{lstm_forward.1} parent=1 // pred_fallthru
      _
    // Predicated region
    $region14: #{lstm_forward.1} parent=1 // pred_check
      _
    $region15: #{lstm_forward.1} parent=1 // pred_check_branch
      %23 = sbr.rel (0) target = $region17
    $region16: #{lstm_forward.1} parent=1 // pred_region
      _
    $region17: #{lstm_forward.1} parent=1 // pred_fallthru
      _
    // Predicated region
    $region18: #{lstm_forward.1} parent=1 // pred_check
      _
    $region19: #{lstm_forward.1} parent=1 // pred_check_branch
      %25 = sbr.rel (0) target = $region21
    $region20: #{lstm_forward.1} parent=1 // pred_region
      _
    $region21: #{lstm_forward.1} parent=1 // pred_fallthru
      _
    // Predicated region
    $region22: #{lstm_forward.1} parent=1 // pred_check
      _
    $region23: #{lstm_forward.1} parent=1 // pred_check_branch
      %27 = sbr.rel (0) target = $region25
    $region24: #{lstm_forward.1} parent=1 // pred_region
      _
    $region25: #{lstm_forward.1} parent=1 // pred_fallthru
      _
    // Predicated region
    $region26: #{lstm_forward.1} parent=1 // pred_check
      _
    $region27: #{lstm_forward.1} parent=1 // pred_check_branch
      %29 = sbr.rel (0) target = $region29
    $region28: #{lstm_forward.1} parent=1 // pred_region
      _
    $region29: #{lstm_forward.1} parent=1 // pred_fallthru
      _
    // Predicated region
    $region30: #{lstm_forward.1} parent=1 // pred_check
      _
    $region31: #{lstm_forward.1} parent=1 // pred_check_branch
      %31 = sbr.rel (0) target = $region33
    $region32: #{lstm_forward.1} parent=1 // pred_region
      _
    $region33: #{lstm_forward.1} parent=1 // pred_fallthru
      _
    // Predicated region
    $region34: #{lstm_forward.1} parent=1 // pred_check
      _
    $region35: #{lstm_forward.1} parent=1 // pred_check_branch
      %33 = sbr.rel (0) target = $region37
    $region36: #{lstm_forward.1} parent=1 // pred_region
      _
    $region37: #{lstm_forward.1} parent=1 // pred_fallthru
      _
    // Predicated region
    $region38: #{lstm_forward.1} parent=1 // pred_check
      _
    $region39: #{lstm_forward.1} parent=1 // pred_check_branch
      %35 = sbr.rel (0) target = $region41
    $region40: #{lstm_forward.1} parent=1 // pred_region
      _
    $region41: #{lstm_forward.1} parent=1 // pred_fallthru
      _
    %v37 = vld [vmem:[%s1] sm:$0x3]
    %v38 = vld [vmem:[%s2] sm:$0x3]
    %v39 = vld [vmem:[%s3] sm:$0xf]
    %v40 = vld [vmem:[%s3 + $0x4] sm:$0xf]
    %v41 = vld [vmem:[%s3 + $0x8] sm:$0xf]
    %v42 = vld [vmem:[%s3 + $0xc] sm:$0xf]
    %v43 = vld [vmem:[%s4] sm:$0xf]
    %v44 = vld [vmem:[%s4 + $0x4] sm:$0xf]
    %v45 = vld [vmem:[%s4 + $0x8] sm:$0xf]
    %v46 = vld [vmem:[%s4 + $0xc] sm:$0xf]
    %v47 = vld [vmem:[%s5] sm:$0x1]
    %v49 = vperm.slane %v47, 0
    %v51 = vld [vmem:[%s6] sm:$0x1]
    %v53 = vperm.slane %v51, 0
    %v55 = vld [vmem:[%s0] sm:$0x1]
    %vm56 = vcmask 31744
    %v58 = vsel %vm56, %v55, 0
    %vm60 = vcmask 1041408
    %v62 = vsel %vm60, %v37, 0
    %64 = vmatpush.bf16.msra.mxu0 0
    %65 = vmatpush.bf16.msra.mxu0 0
    %66 = vmatpush.bf16.msra.mxu0 0
    %67 = vmatpush.bf16.msra.mxu0 0
    %68 = vmatpush.bf16.msra.mxu0 0
    %69 = vmatpush.bf16.msra.mxu0 0
    %70 = vmatpush.bf16.msra.mxu0 0
    %71 = vmatpush.bf16.msra.mxu0 %v62
    %72 = vmatmul.bf16.gmra.mxu0 %v58
    %v73 = vpop.f32.mrf.mxu0
    %v74 = vadd.f32 %v49, %v73
    %v75 = vpop.f32.mrf.mxu0
    %76 = vdwg.mxu0
    %v81 = vunpack.c.l.b16 %v39
    %v82 = vunpack.c.l.b16 %v40
    %v83 = vunpack.c.l.b16 %v41
    %v84 = vunpack.c.l.b16 %v42
    %v85 = vpack.c.b16 %v82, %v81
    %v86 = vpack.c.b16 %v84, %v83
    %vm89 = vcmask 261120
    %v91 = vsel %vm89, 0, 0
    %93 = vmatpush.bf16.msra.mxu0 0
    %94 = vmatpush.bf16.msra.mxu0 0
    %95 = vmatpush.bf16.msra.mxu0 0
    %96 = vmatpush.bf16.msra.mxu0 0
    %97 = vmatpush.bf16.msra.mxu0 0
    %98 = vmatpush.bf16.msra.mxu0 0
    %99 = vmatpush.bf16.msra.mxu0 %v86
    %100 = vmatpush.bf16.msra.mxu0 %v85
    %101 = vmatmul.bf16.gmra.mxu0 %v91
    %v102 = vpop.f32.mrf.mxu0
    %v103 = vadd.f32 0.0, %v102
    %v104 = vpop.f32.mrf.mxu0
    %105 = vdwg.mxu0
    %v106 = vadd.f32 %v74, %v103
    %v107 = vxor.u32 %v106, 2147483648
    %v108 = vmul.f32 %v107, 1.442695
    %v109 = vpow.pop %v108
    %v110 = vadd.f32 %v109, 1.0
    %v111 = vrcp.pop %v110
    %v112 = vmul.f32 %v110, %v111
    %v113 = vsub.f32 1.0, %v112
    %v114 = vmul.f32 %v111, %v113
    %v115 = vadd.f32 %v111, %v114
    %vm116 = vweird.f32 %v110
    %vm117 = vweird.f32 %v111
    %vm118 = vmor %vm116, %vm117
    %v119 = vsel %vm118, %v111, %v115
    %v120 = vand.u32 2147483647, %v110
    %vm121 = vcmp.eq.f32.partialorder %v120, 8.507059e+37
    %v122 = vand.u32 %v110, 2147483648
    %v123 = vor.u32 1.1754944e-38, %v122
    %v124 = vsel %vm121, %v123, %v119
    %v125 = vmul.f32 1.0, %v124
    %v126 = vtanh.pop %v106
    %v127 = vmul.f32 %v125, 0.0
    %129 = vrot.lane.b32.xlu0 %v126, 32
    %v130 = vpop.permute.xlu0 %129
    %v132 = vmul.f32 %v125, %v130
    %134 = vrot.lane.b32.xlu0 %v132, 32
    %v135 = vpop.permute.xlu0 %134
    %v137 = vadd.f32 %v127, %v135
    %v138 = vtanh.pop %v137
    %140 = vrot.lane.b32.xlu0 %v138, 32
    %v141 = vpop.permute.xlu0 %140
    %v143 = vmul.f32 %v125, %v141
    %v144 = vld [vmem:[%s0 + $0x4] sm:$0x8]
    %v146 = vunpack.c.l.b16 %v144
    %v147 = vpack.c.b16 %v146, %v146
    %v148 = vrot.slane %v147, 3
    %v150 = vsel %vm56, %v148, 0
    %v153 = vsel %vm60, %v38, 0
    %155 = vmatpush.bf16.msra.mxu0 0
    %156 = vmatpush.bf16.msra.mxu0 0
    %157 = vmatpush.bf16.msra.mxu0 0
    %158 = vmatpush.bf16.msra.mxu0 0
    %159 = vmatpush.bf16.msra.mxu0 0
    %160 = vmatpush.bf16.msra.mxu0 0
    %161 = vmatpush.bf16.msra.mxu0 0
    %162 = vmatpush.bf16.msra.mxu0 %v153
    %163 = vmatmul.bf16.gmra.mxu0 %v150
    %v164 = vpop.f32.mrf.mxu0
    %v165 = vadd.f32 %v53, %v164
    %v166 = vpop.f32.mrf.mxu0
    %167 = vdwg.mxu0
    %v172 = vunpack.c.l.b16 %v43
    %v173 = vunpack.c.l.b16 %v44
    %v174 = vunpack.c.l.b16 %v45
    %v175 = vunpack.c.l.b16 %v46
    %v176 = vpack.c.b16 %v173, %v172
    %v177 = vpack.c.b16 %v175, %v174
    %180 = vmatpush.bf16.msra.mxu0 0
    %181 = vmatpush.bf16.msra.mxu0 0
    %182 = vmatpush.bf16.msra.mxu0 0
    %183 = vmatpush.bf16.msra.mxu0 0
    %184 = vmatpush.bf16.msra.mxu0 0
    %185 = vmatpush.bf16.msra.mxu0 0
    %186 = vmatpush.bf16.msra.mxu0 %v177
    %187 = vmatpush.bf16.msra.mxu0 %v176
    %188 = vmatmul.bf16.gmra.mxu0 %v91
    %v189 = vpop.f32.mrf.mxu0
    %v190 = vadd.f32 0.0, %v189
    %v191 = vpop.f32.mrf.mxu0
    %192 = vdwg.mxu0
    %v193 = vadd.f32 %v165, %v190
    %v194 = vxor.u32 %v193, 2147483648
    %v195 = vmul.f32 %v194, 1.442695
    %v196 = vpow.pop %v195
    %v197 = vadd.f32 %v196, 1.0
    %v198 = vrcp.pop %v197
    %v199 = vmul.f32 %v197, %v198
    %v200 = vsub.f32 1.0, %v199
    %v201 = vmul.f32 %v198, %v200
    %v202 = vadd.f32 %v198, %v201
    %vm203 = vweird.f32 %v197
    %vm204 = vweird.f32 %v198
    %vm205 = vmor %vm203, %vm204
    %v206 = vsel %vm205, %v198, %v202
    %v207 = vand.u32 2147483647, %v197
    %vm208 = vcmp.eq.f32.partialorder %v207, 8.507059e+37
    %v209 = vand.u32 %v197, 2147483648
    %v210 = vor.u32 1.1754944e-38, %v209
    %v211 = vsel %vm208, %v210, %v206
    %v212 = vmul.f32 1.0, %v211
    %v213 = vtanh.pop %v193
    %v214 = vmul.f32 %v212, 0.0
    %216 = vrot.lane.b32.xlu0 %v213, 32
    %v217 = vpop.permute.xlu0 %216
    %v219 = vmul.f32 %v212, %v217
    %221 = vrot.lane.b32.xlu0 %v219, 32
    %v222 = vpop.permute.xlu0 %221
    %v224 = vadd.f32 %v214, %v222
    %v225 = vtanh.pop %v224
    %227 = vrot.lane.b32.xlu0 %v225, 32
    %v228 = vpop.permute.xlu0 %227
    %v230 = vmul.f32 %v212, %v228
    %v231 = vld [vmem:[%s0] sm:$0x2]
    %v233 = vunpack.c.l.b16 %v231
    %v234 = vpack.c.b16 %v233, %v233
    %v235 = vrot.slane %v234, 1
    %v237 = vsel %vm56, %v235, 0
    %239 = vmatpush.bf16.msra.mxu0 0
    %240 = vmatpush.bf16.msra.mxu0 0
    %241 = vmatpush.bf16.msra.mxu0 0
    %242 = vmatpush.bf16.msra.mxu0 0
    %243 = vmatpush.bf16.msra.mxu0 0
    %244 = vmatpush.bf16.msra.mxu0 0
    %245 = vmatpush.bf16.msra.mxu0 0
    %246 = vmatpush.bf16.msra.mxu0 %v62
    %247 = vmatmul.bf16.gmra.mxu0 %v237
    %v248 = vpop.f32.mrf.mxu0
    %v249 = vadd.f32 %v49, %v248
    %v250 = vpop.f32.mrf.mxu0
    %251 = vdwg.mxu0
    %v252 = vpack.c.bf16 %v143, %v143
    %254 = vrot.lane.b32.xlu0 %v252, 64
    %v255 = vpop.permute.xlu0 %254
    %v257 = vsel %vm89, %v255, 0
    %259 = vmatpush.bf16.msra.mxu0 0
    %260 = vmatpush.bf16.msra.mxu0 0
    %261 = vmatpush.bf16.msra.mxu0 0
    %262 = vmatpush.bf16.msra.mxu0 0
    %263 = vmatpush.bf16.msra.mxu0 0
    %264 = vmatpush.bf16.msra.mxu0 0
    %265 = vmatpush.bf16.msra.mxu0 %v86
    %266 = vmatpush.bf16.msra.mxu0 %v85
    %267 = vmatmul.bf16.gmra.mxu0 %v257
    %v268 = vpop.f32.mrf.mxu0
    %v269 = vadd.f32 0.0, %v268
    %v270 = vpop.f32.mrf.mxu0
    %271 = vdwg.mxu0
    %v272 = vadd.f32 %v249, %v269
    %v273 = vxor.u32 %v272, 2147483648
    %v274 = vmul.f32 %v273, 1.442695
    %v275 = vpow.pop %v274
    %v276 = vadd.f32 %v275, 1.0
    %v277 = vrcp.pop %v276
    %v278 = vmul.f32 %v276, %v277
    %v279 = vsub.f32 1.0, %v278
    %v280 = vmul.f32 %v277, %v279
    %v281 = vadd.f32 %v277, %v280
    %vm282 = vweird.f32 %v276
    %vm283 = vweird.f32 %v277
    %vm284 = vmor %vm282, %vm283
    %v285 = vsel %vm284, %v277, %v281
    %v286 = vand.u32 2147483647, %v276
    %vm287 = vcmp.eq.f32.partialorder %v286, 8.507059e+37
    %v288 = vand.u32 %v276, 2147483648
    %v289 = vor.u32 1.1754944e-38, %v288
    %v290 = vsel %vm287, %v289, %v285
    %v291 = vmul.f32 1.0, %v290
    %v292 = vtanh.pop %v272
    %v293 = vmul.f32 %v291, %v137
    %295 = vrot.lane.b32.xlu0 %v292, 32
    %v296 = vpop.permute.xlu0 %295
    %v298 = vmul.f32 %v291, %v296
    %300 = vrot.lane.b32.xlu0 %v298, 32
    %v301 = vpop.permute.xlu0 %300
    %v303 = vadd.f32 %v293, %v301
    %v304 = vtanh.pop %v303
    %306 = vrot.lane.b32.xlu0 %v304, 32
    %v307 = vpop.permute.xlu0 %306
    %v309 = vmul.f32 %v291, %v307
    %v310 = vld [vmem:[%s0 + $0x4] sm:$0x4]
    %v312 = vunpack.c.l.b16 %v310
    %v313 = vpack.c.b16 %v312, %v312
    %v314 = vrot.slane %v313, 2
    %v316 = vsel %vm56, %v314, 0
    %318 = vmatpush.bf16.msra.mxu0 0
    %319 = vmatpush.bf16.msra.mxu0 0
    %320 = vmatpush.bf16.msra.mxu0 0
    %321 = vmatpush.bf16.msra.mxu0 0
    %322 = vmatpush.bf16.msra.mxu0 0
    %323 = vmatpush.bf16.msra.mxu0 0
    %324 = vmatpush.bf16.msra.mxu0 0
    %325 = vmatpush.bf16.msra.mxu0 %v153
    %326 = vmatmul.bf16.gmra.mxu0 %v316
    %v327 = vpop.f32.mrf.mxu0
    %v328 = vadd.f32 %v53, %v327
    %v329 = vpop.f32.mrf.mxu0
    %330 = vdwg.mxu0
    %v331 = vpack.c.bf16 %v230, %v230
    %333 = vrot.lane.b32.xlu0 %v331, 64
    %v334 = vpop.permute.xlu0 %333
    %v336 = vsel %vm89, %v334, 0
    %338 = vmatpush.bf16.msra.mxu0 0
    %339 = vmatpush.bf16.msra.mxu0 0
    %340 = vmatpush.bf16.msra.mxu0 0
    %341 = vmatpush.bf16.msra.mxu0 0
    %342 = vmatpush.bf16.msra.mxu0 0
    %343 = vmatpush.bf16.msra.mxu0 0
    %344 = vmatpush.bf16.msra.mxu0 %v177
    %345 = vmatpush.bf16.msra.mxu0 %v176
    %346 = vmatmul.bf16.gmra.mxu0 %v336
    %v347 = vpop.f32.mrf.mxu0
    %v348 = vadd.f32 0.0, %v347
    %v349 = vpop.f32.mrf.mxu0
    %350 = vdwg.mxu0
    %v351 = vadd.f32 %v328, %v348
    %v352 = vxor.u32 %v351, 2147483648
    %v353 = vmul.f32 %v352, 1.442695
    %v354 = vpow.pop %v353
    %v355 = vadd.f32 %v354, 1.0
    %v356 = vrcp.pop %v355
    %v357 = vmul.f32 %v355, %v356
    %v358 = vsub.f32 1.0, %v357
    %v359 = vmul.f32 %v356, %v358
    %v360 = vadd.f32 %v356, %v359
    %vm361 = vweird.f32 %v355
    %vm362 = vweird.f32 %v356
    %vm363 = vmor %vm361, %vm362
    %v364 = vsel %vm363, %v356, %v360
    %v365 = vand.u32 2147483647, %v355
    %vm366 = vcmp.eq.f32.partialorder %v365, 8.507059e+37
    %v367 = vand.u32 %v355, 2147483648
    %v368 = vor.u32 1.1754944e-38, %v367
    %v369 = vsel %vm366, %v368, %v364
    %v370 = vmul.f32 1.0, %v369
    %v371 = vtanh.pop %v351
    %v372 = vmul.f32 %v370, %v224
    %374 = vrot.lane.b32.xlu0 %v371, 32
    %v375 = vpop.permute.xlu0 %374
    %v377 = vmul.f32 %v370, %v375
    %379 = vrot.lane.b32.xlu0 %v377, 32
    %v380 = vpop.permute.xlu0 %379
    %v382 = vadd.f32 %v372, %v380
    %v383 = vtanh.pop %v382
    %385 = vrot.lane.b32.xlu0 %v383, 32
    %v386 = vpop.permute.xlu0 %385
    %v388 = vmul.f32 %v370, %v386
    %v389 = vld [vmem:[%s0] sm:$0x4]
    %v391 = vunpack.c.l.b16 %v389
    %v392 = vpack.c.b16 %v391, %v391
    %v393 = vrot.slane %v392, 2
    %v395 = vsel %vm56, %v393, 0
    %397 = vmatpush.bf16.msra.mxu0 0
    %398 = vmatpush.bf16.msra.mxu0 0
    %399 = vmatpush.bf16.msra.mxu0 0
    %400 = vmatpush.bf16.msra.mxu0 0
    %401 = vmatpush.bf16.msra.mxu0 0
    %402 = vmatpush.bf16.msra.mxu0 0
    %403 = vmatpush.bf16.msra.mxu0 0
    %404 = vmatpush.bf16.msra.mxu0 %v62
    %405 = vmatmul.bf16.gmra.mxu0 %v395
    %v406 = vpop.f32.mrf.mxu0
    %v407 = vadd.f32 %v49, %v406
    %v408 = vpop.f32.mrf.mxu0
    %409 = vdwg.mxu0
    %v410 = vpack.c.bf16 %v309, %v309
    %412 = vrot.lane.b32.xlu0 %v410, 64
    %v413 = vpop.permute.xlu0 %412
    %v415 = vsel %vm89, %v413, 0
    %417 = vmatpush.bf16.msra.mxu0 0
    %418 = vmatpush.bf16.msra.mxu0 0
    %419 = vmatpush.bf16.msra.mxu0 0
    %420 = vmatpush.bf16.msra.mxu0 0
    %421 = vmatpush.bf16.msra.mxu0 0
    %422 = vmatpush.bf16.msra.mxu0 0
    %423 = vmatpush.bf16.msra.mxu0 %v86
    %424 = vmatpush.bf16.msra.mxu0 %v85
    %425 = vmatmul.bf16.gmra.mxu0 %v415
    %v426 = vpop.f32.mrf.mxu0
    %v427 = vadd.f32 0.0, %v426
    %v428 = vpop.f32.mrf.mxu0
    %429 = vdwg.mxu0
    %v430 = vadd.f32 %v407, %v427
    %v431 = vxor.u32 %v430, 2147483648
    %v432 = vmul.f32 %v431, 1.442695
    %v433 = vpow.pop %v432
    %v434 = vadd.f32 %v433, 1.0
    %v435 = vrcp.pop %v434
    %v436 = vmul.f32 %v434, %v435
    %v437 = vsub.f32 1.0, %v436
    %v438 = vmul.f32 %v435, %v437
    %v439 = vadd.f32 %v435, %v438
    %vm440 = vweird.f32 %v434
    %vm441 = vweird.f32 %v435
    %vm442 = vmor %vm440, %vm441
    %v443 = vsel %vm442, %v435, %v439
    %v444 = vand.u32 2147483647, %v434
    %vm445 = vcmp.eq.f32.partialorder %v444, 8.507059e+37
    %v446 = vand.u32 %v434, 2147483648
    %v447 = vor.u32 1.1754944e-38, %v446
    %v448 = vsel %vm445, %v447, %v443
    %v449 = vmul.f32 1.0, %v448
    %v450 = vtanh.pop %v430
    %v451 = vmul.f32 %v449, %v303
    %453 = vrot.lane.b32.xlu0 %v450, 32
    %v454 = vpop.permute.xlu0 %453
    %v456 = vmul.f32 %v449, %v454
    %458 = vrot.lane.b32.xlu0 %v456, 32
    %v459 = vpop.permute.xlu0 %458
    %v461 = vadd.f32 %v451, %v459
    %v462 = vtanh.pop %v461
    %464 = vrot.lane.b32.xlu0 %v462, 32
    %v465 = vpop.permute.xlu0 %464
    %v467 = vmul.f32 %v449, %v465
    %v468 = vld [vmem:[%s0 + $0x4] sm:$0x2]
    %v470 = vunpack.c.l.b16 %v468
    %v471 = vpack.c.b16 %v470, %v470
    %v472 = vrot.slane %v471, 1
    %v474 = vsel %vm56, %v472, 0
    %476 = vmatpush.bf16.msra.mxu0 0
    %477 = vmatpush.bf16.msra.mxu0 0
    %478 = vmatpush.bf16.msra.mxu0 0
    %479 = vmatpush.bf16.msra.mxu0 0
    %480 = vmatpush.bf16.msra.mxu0 0
    %481 = vmatpush.bf16.msra.mxu0 0
    %482 = vmatpush.bf16.msra.mxu0 0
    %483 = vmatpush.bf16.msra.mxu0 %v153
    %484 = vmatmul.bf16.gmra.mxu0 %v474
    %v485 = vpop.f32.mrf.mxu0
    %v486 = vadd.f32 %v53, %v485
    %v487 = vpop.f32.mrf.mxu0
    %488 = vdwg.mxu0
    %v489 = vpack.c.bf16 %v388, %v388
    %491 = vrot.lane.b32.xlu0 %v489, 64
    %v492 = vpop.permute.xlu0 %491
    %v494 = vsel %vm89, %v492, 0
    %496 = vmatpush.bf16.msra.mxu0 0
    %497 = vmatpush.bf16.msra.mxu0 0
    %498 = vmatpush.bf16.msra.mxu0 0
    %499 = vmatpush.bf16.msra.mxu0 0
    %500 = vmatpush.bf16.msra.mxu0 0
    %501 = vmatpush.bf16.msra.mxu0 0
    %502 = vmatpush.bf16.msra.mxu0 %v177
    %503 = vmatpush.bf16.msra.mxu0 %v176
    %504 = vmatmul.bf16.gmra.mxu0 %v494
    %v505 = vpop.f32.mrf.mxu0
    %v506 = vadd.f32 0.0, %v505
    %v507 = vpop.f32.mrf.mxu0
    %508 = vdwg.mxu0
    %v509 = vadd.f32 %v486, %v506
    %v510 = vxor.u32 %v509, 2147483648
    %v511 = vmul.f32 %v510, 1.442695
    %v512 = vpow.pop %v511
    %v513 = vadd.f32 %v512, 1.0
    %v514 = vrcp.pop %v513
    %v515 = vmul.f32 %v513, %v514
    %v516 = vsub.f32 1.0, %v515
    %v517 = vmul.f32 %v514, %v516
    %v518 = vadd.f32 %v514, %v517
    %vm519 = vweird.f32 %v513
    %vm520 = vweird.f32 %v514
    %vm521 = vmor %vm519, %vm520
    %v522 = vsel %vm521, %v514, %v518
    %v523 = vand.u32 2147483647, %v513
    %vm524 = vcmp.eq.f32.partialorder %v523, 8.507059e+37
    %v525 = vand.u32 %v513, 2147483648
    %v526 = vor.u32 1.1754944e-38, %v525
    %v527 = vsel %vm524, %v526, %v522
    %v528 = vmul.f32 1.0, %v527
    %v529 = vtanh.pop %v509
    %v530 = vmul.f32 %v528, %v382
    %532 = vrot.lane.b32.xlu0 %v529, 32
    %v533 = vpop.permute.xlu0 %532
    %v535 = vmul.f32 %v528, %v533
    %537 = vrot.lane.b32.xlu0 %v535, 32
    %v538 = vpop.permute.xlu0 %537
    %v540 = vadd.f32 %v530, %v538
    %v541 = vtanh.pop %v540
    %543 = vrot.lane.b32.xlu0 %v541, 32
    %v544 = vpop.permute.xlu0 %543
    %v546 = vmul.f32 %v528, %v544
    %v547 = vld [vmem:[%s0] sm:$0x8]
    %v549 = vunpack.c.l.b16 %v547
    %v550 = vpack.c.b16 %v549, %v549
    %v551 = vrot.slane %v550, 3
    %v553 = vsel %vm56, %v551, 0
    %555 = vmatpush.bf16.msra.mxu0 0
    %556 = vmatpush.bf16.msra.mxu0 0
    %557 = vmatpush.bf16.msra.mxu0 0
    %558 = vmatpush.bf16.msra.mxu0 0
    %559 = vmatpush.bf16.msra.mxu0 0
    %560 = vmatpush.bf16.msra.mxu0 0
    %561 = vmatpush.bf16.msra.mxu0 0
    %562 = vmatpush.bf16.msra.mxu0 %v62
    %563 = vmatmul.bf16.gmra.mxu0 %v553
    %v564 = vpop.f32.mrf.mxu0
    %v565 = vadd.f32 %v49, %v564
    %v566 = vpop.f32.mrf.mxu0
    %567 = vdwg.mxu0
    %v568 = vpack.c.bf16 %v467, %v467
    %570 = vrot.lane.b32.xlu0 %v568, 64
    %v571 = vpop.permute.xlu0 %570
    %v573 = vsel %vm89, %v571, 0
    %575 = vmatpush.bf16.msra.mxu0 0
    %576 = vmatpush.bf16.msra.mxu0 0
    %577 = vmatpush.bf16.msra.mxu0 0
    %578 = vmatpush.bf16.msra.mxu0 0
    %579 = vmatpush.bf16.msra.mxu0 0
    %580 = vmatpush.bf16.msra.mxu0 0
    %581 = vmatpush.bf16.msra.mxu0 %v86
    %582 = vmatpush.bf16.msra.mxu0 %v85
    %583 = vmatmul.bf16.gmra.mxu0 %v573
    %v584 = vpop.f32.mrf.mxu0
    %v585 = vadd.f32 0.0, %v584
    %v586 = vpop.f32.mrf.mxu0
    %587 = vdwg.mxu0
    %v588 = vadd.f32 %v565, %v585
    %v589 = vxor.u32 %v588, 2147483648
    %v590 = vmul.f32 %v589, 1.442695
    %v591 = vpow.pop %v590
    %v592 = vadd.f32 %v591, 1.0
    %v593 = vrcp.pop %v592
    %v594 = vmul.f32 %v592, %v593
    %v595 = vsub.f32 1.0, %v594
    %v596 = vmul.f32 %v593, %v595
    %v597 = vadd.f32 %v593, %v596
    %vm598 = vweird.f32 %v592
    %vm599 = vweird.f32 %v593
    %vm600 = vmor %vm598, %vm599
    %v601 = vsel %vm600, %v593, %v597
    %v602 = vand.u32 2147483647, %v592
    %vm603 = vcmp.eq.f32.partialorder %v602, 8.507059e+37
    %v604 = vand.u32 %v592, 2147483648
    %v605 = vor.u32 1.1754944e-38, %v604
    %v606 = vsel %vm603, %v605, %v601
    %v607 = vmul.f32 1.0, %v606
    %v608 = vtanh.pop %v588
    %v609 = vmul.f32 %v607, %v461
    %611 = vrot.lane.b32.xlu0 %v608, 32
    %v612 = vpop.permute.xlu0 %611
    %v614 = vmul.f32 %v607, %v612
    %616 = vrot.lane.b32.xlu0 %v614, 32
    %v617 = vpop.permute.xlu0 %616
    %v619 = vadd.f32 %v609, %v617
    %v620 = vtanh.pop %v619
    %622 = vrot.lane.b32.xlu0 %v620, 32
    %v623 = vpop.permute.xlu0 %622
    %v625 = vmul.f32 %v607, %v623
    %v626 = vld [vmem:[%s0 + $0x4] sm:$0x1]
    %v628 = vsel %vm56, %v626, 0
    %630 = vmatpush.bf16.msra.mxu0 0
    %631 = vmatpush.bf16.msra.mxu0 0
    %632 = vmatpush.bf16.msra.mxu0 0
    %633 = vmatpush.bf16.msra.mxu0 0
    %634 = vmatpush.bf16.msra.mxu0 0
    %635 = vmatpush.bf16.msra.mxu0 0
    %636 = vmatpush.bf16.msra.mxu0 0
    %637 = vmatpush.bf16.msra.mxu0 %v153
    %638 = vmatmul.bf16.gmra.mxu0 %v628
    %v639 = vpop.f32.mrf.mxu0
    %v640 = vadd.f32 %v53, %v639
    %v641 = vpop.f32.mrf.mxu0
    %642 = vdwg.mxu0
    %v643 = vpack.c.bf16 %v546, %v546
    %645 = vrot.lane.b32.xlu0 %v643, 64
    %v646 = vpop.permute.xlu0 %645
    %v648 = vsel %vm89, %v646, 0
    %650 = vmatpush.bf16.msra.mxu0 0
    %651 = vmatpush.bf16.msra.mxu0 0
    %652 = vmatpush.bf16.msra.mxu0 0
    %653 = vmatpush.bf16.msra.mxu0 0
    %654 = vmatpush.bf16.msra.mxu0 0
    %655 = vmatpush.bf16.msra.mxu0 0
    %656 = vmatpush.bf16.msra.mxu0 %v177
    %657 = vmatpush.bf16.msra.mxu0 %v176
    %658 = vmatmul.bf16.gmra.mxu0 %v648
    %v659 = vpop.f32.mrf.mxu0
    %v660 = vadd.f32 0.0, %v659
    %v661 = vpop.f32.mrf.mxu0
    %662 = vdwg.mxu0
    %v663 = vadd.f32 %v640, %v660
    %v664 = vxor.u32 %v663, 2147483648
    %v665 = vmul.f32 %v664, 1.442695
    %v666 = vpow.pop %v665
    %v667 = vadd.f32 %v666, 1.0
    %v668 = vrcp.pop %v667
    %v669 = vmul.f32 %v667, %v668
    %v670 = vsub.f32 1.0, %v669
    %v671 = vmul.f32 %v668, %v670
    %v672 = vadd.f32 %v668, %v671
    %vm673 = vweird.f32 %v667
    %vm674 = vweird.f32 %v668
    %vm675 = vmor %vm673, %vm674
    %v676 = vsel %vm675, %v668, %v672
    %v677 = vand.u32 2147483647, %v667
    %vm678 = vcmp.eq.f32.partialorder %v677, 8.507059e+37
    %v679 = vand.u32 %v667, 2147483648
    %v680 = vor.u32 1.1754944e-38, %v679
    %v681 = vsel %vm678, %v680, %v676
    %v682 = vmul.f32 1.0, %v681
    %v683 = vtanh.pop %v663
    %v684 = vmul.f32 %v682, %v540
    %686 = vrot.lane.b32.xlu0 %v683, 32
    %v687 = vpop.permute.xlu0 %686
    %v689 = vmul.f32 %v682, %v687
    %691 = vrot.lane.b32.xlu0 %v689, 32
    %v692 = vpop.permute.xlu0 %691
    %v694 = vadd.f32 %v684, %v692
    %v695 = vtanh.pop %v694
    %697 = vrot.lane.b32.xlu0 %v695, 32
    %v698 = vpop.permute.xlu0 %697
    %v700 = vmul.f32 %v682, %v698
    %701 = vmatpush.bf16.msra.mxu0 0
    %702 = vmatpush.bf16.msra.mxu0 0
    %703 = vmatpush.bf16.msra.mxu0 0
    %704 = vmatpush.bf16.msra.mxu0 0
    %705 = vmatpush.bf16.msra.mxu0 0
    %706 = vmatpush.bf16.msra.mxu0 0
    %707 = vmatpush.bf16.msra.mxu0 0
    %708 = vmatpush.bf16.msra.mxu0 %v62
    %709 = vmatmul.bf16.gmra.mxu0 %v628
    %v710 = vpop.f32.mrf.mxu0
    %v711 = vadd.f32 %v49, %v710
    %v712 = vpop.f32.mrf.mxu0
    %713 = vdwg.mxu0
    %v714 = vpack.c.bf16 %v625, %v625
    %716 = vrot.lane.b32.xlu0 %v714, 64
    %v717 = vpop.permute.xlu0 %716
    %v719 = vsel %vm89, %v717, 0
    %721 = vmatpush.bf16.msra.mxu0 0
    %722 = vmatpush.bf16.msra.mxu0 0
    %723 = vmatpush.bf16.msra.mxu0 0
    %724 = vmatpush.bf16.msra.mxu0 0
    %725 = vmatpush.bf16.msra.mxu0 0
    %726 = vmatpush.bf16.msra.mxu0 0
    %727 = vmatpush.bf16.msra.mxu0 %v86
    %728 = vmatpush.bf16.msra.mxu0 %v85
    %729 = vmatmul.bf16.gmra.mxu0 %v719
    %v730 = vpop.f32.mrf.mxu0
    %v731 = vadd.f32 0.0, %v730
    %v732 = vpop.f32.mrf.mxu0
    %733 = vdwg.mxu0
    %v734 = vadd.f32 %v711, %v731
    %v735 = vxor.u32 %v734, 2147483648
    %v736 = vmul.f32 %v735, 1.442695
    %v737 = vpow.pop %v736
    %v738 = vadd.f32 %v737, 1.0
    %v739 = vrcp.pop %v738
    %v740 = vmul.f32 %v738, %v739
    %v741 = vsub.f32 1.0, %v740
    %v742 = vmul.f32 %v739, %v741
    %v743 = vadd.f32 %v739, %v742
    %vm744 = vweird.f32 %v738
    %vm745 = vweird.f32 %v739
    %vm746 = vmor %vm744, %vm745
    %v747 = vsel %vm746, %v739, %v743
    %v748 = vand.u32 2147483647, %v738
    %vm749 = vcmp.eq.f32.partialorder %v748, 8.507059e+37
    %v750 = vand.u32 %v738, 2147483648
    %v751 = vor.u32 1.1754944e-38, %v750
    %v752 = vsel %vm749, %v751, %v747
    %v753 = vmul.f32 1.0, %v752
    %v754 = vtanh.pop %v734
    %v755 = vmul.f32 %v753, %v619
    %757 = vrot.lane.b32.xlu0 %v754, 32
    %v758 = vpop.permute.xlu0 %757
    %v760 = vmul.f32 %v753, %v758
    %762 = vrot.lane.b32.xlu0 %v760, 32
    %v763 = vpop.permute.xlu0 %762
    %v765 = vadd.f32 %v755, %v763
    %v766 = vtanh.pop %v765
    %768 = vrot.lane.b32.xlu0 %v766, 32
    %v769 = vpop.permute.xlu0 %768
    %v771 = vmul.f32 %v753, %v769
    %772 = vmatpush.bf16.msra.mxu0 0
    %773 = vmatpush.bf16.msra.mxu0 0
    %774 = vmatpush.bf16.msra.mxu0 0
    %775 = vmatpush.bf16.msra.mxu0 0
    %776 = vmatpush.bf16.msra.mxu0 0
    %777 = vmatpush.bf16.msra.mxu0 0
    %778 = vmatpush.bf16.msra.mxu0 0
    %779 = vmatpush.bf16.msra.mxu0 %v153
    %780 = vmatmul.bf16.gmra.mxu0 %v553
    %v781 = vpop.f32.mrf.mxu0
    %v782 = vadd.f32 %v53, %v781
    %v783 = vpop.f32.mrf.mxu0
    %784 = vdwg.mxu0
    %v785 = vpack.c.bf16 %v700, %v700
    %787 = vrot.lane.b32.xlu0 %v785, 64
    %v788 = vpop.permute.xlu0 %787
    %v790 = vsel %vm89, %v788, 0
    %792 = vmatpush.bf16.msra.mxu0 0
    %793 = vmatpush.bf16.msra.mxu0 0
    %794 = vmatpush.bf16.msra.mxu0 0
    %795 = vmatpush.bf16.msra.mxu0 0
    %796 = vmatpush.bf16.msra.mxu0 0
    %797 = vmatpush.bf16.msra.mxu0 0
    %798 = vmatpush.bf16.msra.mxu0 %v177
    %799 = vmatpush.bf16.msra.mxu0 %v176
    %800 = vmatmul.bf16.gmra.mxu0 %v790
    %v801 = vpop.f32.mrf.mxu0
    %v802 = vadd.f32 0.0, %v801
    %v803 = vpop.f32.mrf.mxu0
    %804 = vdwg.mxu0
    %v805 = vadd.f32 %v782, %v802
    %v806 = vxor.u32 %v805, 2147483648
    %v807 = vmul.f32 %v806, 1.442695
    %v808 = vpow.pop %v807
    %v809 = vadd.f32 %v808, 1.0
    %v810 = vrcp.pop %v809
    %v811 = vmul.f32 %v809, %v810
    %v812 = vsub.f32 1.0, %v811
    %v813 = vmul.f32 %v810, %v812
    %v814 = vadd.f32 %v810, %v813
    %vm815 = vweird.f32 %v809
    %vm816 = vweird.f32 %v810
    %vm817 = vmor %vm815, %vm816
    %v818 = vsel %vm817, %v810, %v814
    %v819 = vand.u32 2147483647, %v809
    %vm820 = vcmp.eq.f32.partialorder %v819, 8.507059e+37
    %v821 = vand.u32 %v809, 2147483648
    %v822 = vor.u32 1.1754944e-38, %v821
    %v823 = vsel %vm820, %v822, %v818
    %v824 = vmul.f32 1.0, %v823
    %v825 = vtanh.pop %v805
    %v826 = vmul.f32 %v824, %v694
    %828 = vrot.lane.b32.xlu0 %v825, 32
    %v829 = vpop.permute.xlu0 %828
    %v831 = vmul.f32 %v824, %v829
    %833 = vrot.lane.b32.xlu0 %v831, 32
    %v834 = vpop.permute.xlu0 %833
    %v836 = vadd.f32 %v826, %v834
    %v837 = vtanh.pop %v836
    %839 = vrot.lane.b32.xlu0 %v837, 32
    %v840 = vpop.permute.xlu0 %839
    %v842 = vmul.f32 %v824, %v840
    %843 = vmatpush.bf16.msra.mxu0 0
    %844 = vmatpush.bf16.msra.mxu0 0
    %845 = vmatpush.bf16.msra.mxu0 0
    %846 = vmatpush.bf16.msra.mxu0 0
    %847 = vmatpush.bf16.msra.mxu0 0
    %848 = vmatpush.bf16.msra.mxu0 0
    %849 = vmatpush.bf16.msra.mxu0 0
    %850 = vmatpush.bf16.msra.mxu0 %v62
    %851 = vmatmul.bf16.gmra.mxu0 %v474
    %v852 = vpop.f32.mrf.mxu0
    %v853 = vadd.f32 %v49, %v852
    %v854 = vpop.f32.mrf.mxu0
    %855 = vdwg.mxu0
    %v856 = vpack.c.bf16 %v771, %v771
    %858 = vrot.lane.b32.xlu0 %v856, 64
    %v859 = vpop.permute.xlu0 %858
    %v861 = vsel %vm89, %v859, 0
    %863 = vmatpush.bf16.msra.mxu0 0
    %864 = vmatpush.bf16.msra.mxu0 0
    %865 = vmatpush.bf16.msra.mxu0 0
    %866 = vmatpush.bf16.msra.mxu0 0
    %867 = vmatpush.bf16.msra.mxu0 0
    %868 = vmatpush.bf16.msra.mxu0 0
    %869 = vmatpush.bf16.msra.mxu0 %v86
    %870 = vmatpush.bf16.msra.mxu0 %v85
    %871 = vmatmul.bf16.gmra.mxu0 %v861
    %v872 = vpop.f32.mrf.mxu0
    %v873 = vadd.f32 0.0, %v872
    %v874 = vpop.f32.mrf.mxu0
    %875 = vdwg.mxu0
    %v876 = vadd.f32 %v853, %v873
    %v877 = vxor.u32 %v876, 2147483648
    %v878 = vmul.f32 %v877, 1.442695
    %v879 = vpow.pop %v878
    %v880 = vadd.f32 %v879, 1.0
    %v881 = vrcp.pop %v880
    %v882 = vmul.f32 %v880, %v881
    %v883 = vsub.f32 1.0, %v882
    %v884 = vmul.f32 %v881, %v883
    %v885 = vadd.f32 %v881, %v884
    %vm886 = vweird.f32 %v880
    %vm887 = vweird.f32 %v881
    %vm888 = vmor %vm886, %vm887
    %v889 = vsel %vm888, %v881, %v885
    %v890 = vand.u32 2147483647, %v880
    %vm891 = vcmp.eq.f32.partialorder %v890, 8.507059e+37
    %v892 = vand.u32 %v880, 2147483648
    %v893 = vor.u32 1.1754944e-38, %v892
    %v894 = vsel %vm891, %v893, %v889
    %v895 = vmul.f32 1.0, %v894
    %v896 = vtanh.pop %v876
    %v897 = vmul.f32 %v895, %v765
    %899 = vrot.lane.b32.xlu0 %v896, 32
    %v900 = vpop.permute.xlu0 %899
    %v902 = vmul.f32 %v895, %v900
    %904 = vrot.lane.b32.xlu0 %v902, 32
    %v905 = vpop.permute.xlu0 %904
    %v907 = vadd.f32 %v897, %v905
    %v908 = vtanh.pop %v907
    %910 = vrot.lane.b32.xlu0 %v908, 32
    %v911 = vpop.permute.xlu0 %910
    %v913 = vmul.f32 %v895, %v911
    %914 = vmatpush.bf16.msra.mxu0 0
    %915 = vmatpush.bf16.msra.mxu0 0
    %916 = vmatpush.bf16.msra.mxu0 0
    %917 = vmatpush.bf16.msra.mxu0 0
    %918 = vmatpush.bf16.msra.mxu0 0
    %919 = vmatpush.bf16.msra.mxu0 0
    %920 = vmatpush.bf16.msra.mxu0 0
    %921 = vmatpush.bf16.msra.mxu0 %v153
    %922 = vmatmul.bf16.gmra.mxu0 %v395
    %v923 = vpop.f32.mrf.mxu0
    %v924 = vadd.f32 %v53, %v923
    %v925 = vpop.f32.mrf.mxu0
    %926 = vdwg.mxu0
    %v927 = vpack.c.bf16 %v842, %v842
    %929 = vrot.lane.b32.xlu0 %v927, 64
    %v930 = vpop.permute.xlu0 %929
    %v932 = vsel %vm89, %v930, 0
    %934 = vmatpush.bf16.msra.mxu0 0
    %935 = vmatpush.bf16.msra.mxu0 0
    %936 = vmatpush.bf16.msra.mxu0 0
    %937 = vmatpush.bf16.msra.mxu0 0
    %938 = vmatpush.bf16.msra.mxu0 0
    %939 = vmatpush.bf16.msra.mxu0 0
    %940 = vmatpush.bf16.msra.mxu0 %v177
    %941 = vmatpush.bf16.msra.mxu0 %v176
    %942 = vmatmul.bf16.gmra.mxu0 %v932
    %v943 = vpop.f32.mrf.mxu0
    %v944 = vadd.f32 0.0, %v943
    %v945 = vpop.f32.mrf.mxu0
    %946 = vdwg.mxu0
    %v947 = vadd.f32 %v924, %v944
    %v948 = vxor.u32 %v947, 2147483648
    %v949 = vmul.f32 %v948, 1.442695
    %v950 = vpow.pop %v949
    %v951 = vadd.f32 %v950, 1.0
    %v952 = vrcp.pop %v951
    %v953 = vmul.f32 %v951, %v952
    %v954 = vsub.f32 1.0, %v953
    %v955 = vmul.f32 %v952, %v954
    %v956 = vadd.f32 %v952, %v955
    %vm957 = vweird.f32 %v951
    %vm958 = vweird.f32 %v952
    %vm959 = vmor %vm957, %vm958
    %v960 = vsel %vm959, %v952, %v956
    %v961 = vand.u32 2147483647, %v951
    %vm962 = vcmp.eq.f32.partialorder %v961, 8.507059e+37
    %v963 = vand.u32 %v951, 2147483648
    %v964 = vor.u32 1.1754944e-38, %v963
    %v965 = vsel %vm962, %v964, %v960
    %v966 = vmul.f32 1.0, %v965
    %v967 = vtanh.pop %v947
    %v968 = vmul.f32 %v966, %v836
    %970 = vrot.lane.b32.xlu0 %v967, 32
    %v971 = vpop.permute.xlu0 %970
    %v973 = vmul.f32 %v966, %v971
    %975 = vrot.lane.b32.xlu0 %v973, 32
    %v976 = vpop.permute.xlu0 %975
    %v978 = vadd.f32 %v968, %v976
    %v979 = vtanh.pop %v978
    %981 = vrot.lane.b32.xlu0 %v979, 32
    %v982 = vpop.permute.xlu0 %981
    %v984 = vmul.f32 %v966, %v982
    %985 = vmatpush.bf16.msra.mxu0 0
    %986 = vmatpush.bf16.msra.mxu0 0
    %987 = vmatpush.bf16.msra.mxu0 0
    %988 = vmatpush.bf16.msra.mxu0 0
    %989 = vmatpush.bf16.msra.mxu0 0
    %990 = vmatpush.bf16.msra.mxu0 0
    %991 = vmatpush.bf16.msra.mxu0 0
    %992 = vmatpush.bf16.msra.mxu0 %v62
    %993 = vmatmul.bf16.gmra.mxu0 %v316
    %v994 = vpop.f32.mrf.mxu0
    %v995 = vadd.f32 %v49, %v994
    %v996 = vpop.f32.mrf.mxu0
    %997 = vdwg.mxu0
    %v998 = vpack.c.bf16 %v913, %v913
    %1000 = vrot.lane.b32.xlu0 %v998, 64
    %v1001 = vpop.permute.xlu0 %1000
    %v1003 = vsel %vm89, %v1001, 0
    %1005 = vmatpush.bf16.msra.mxu0 0
    %1006 = vmatpush.bf16.msra.mxu0 0
    %1007 = vmatpush.bf16.msra.mxu0 0
    %1008 = vmatpush.bf16.msra.mxu0 0
    %1009 = vmatpush.bf16.msra.mxu0 0
    %1010 = vmatpush.bf16.msra.mxu0 0
    %1011 = vmatpush.bf16.msra.mxu0 %v86
    %1012 = vmatpush.bf16.msra.mxu0 %v85
    %1013 = vmatmul.bf16.gmra.mxu0 %v1003
    %v1014 = vpop.f32.mrf.mxu0
    %v1015 = vadd.f32 0.0, %v1014
    %v1016 = vpop.f32.mrf.mxu0
    %1017 = vdwg.mxu0
    %v1018 = vadd.f32 %v995, %v1015
    %v1019 = vxor.u32 %v1018, 2147483648
    %v1020 = vmul.f32 %v1019, 1.442695
    %v1021 = vpow.pop %v1020
    %v1022 = vadd.f32 %v1021, 1.0
    %v1023 = vrcp.pop %v1022
    %v1024 = vmul.f32 %v1022, %v1023
    %v1025 = vsub.f32 1.0, %v1024
    %v1026 = vmul.f32 %v1023, %v1025
    %v1027 = vadd.f32 %v1023, %v1026
    %vm1028 = vweird.f32 %v1022
    %vm1029 = vweird.f32 %v1023
    %vm1030 = vmor %vm1028, %vm1029
    %v1031 = vsel %vm1030, %v1023, %v1027
    %v1032 = vand.u32 2147483647, %v1022
    %vm1033 = vcmp.eq.f32.partialorder %v1032, 8.507059e+37
    %v1034 = vand.u32 %v1022, 2147483648
    %v1035 = vor.u32 1.1754944e-38, %v1034
    %v1036 = vsel %vm1033, %v1035, %v1031
    %v1037 = vmul.f32 1.0, %v1036
    %v1038 = vtanh.pop %v1018
    %v1039 = vmul.f32 %v1037, %v907
    %1041 = vrot.lane.b32.xlu0 %v1038, 32
    %v1042 = vpop.permute.xlu0 %1041
    %v1044 = vmul.f32 %v1037, %v1042
    %1046 = vrot.lane.b32.xlu0 %v1044, 32
    %v1047 = vpop.permute.xlu0 %1046
    %v1049 = vadd.f32 %v1039, %v1047
    %v1050 = vtanh.pop %v1049
    %1052 = vrot.lane.b32.xlu0 %v1050, 32
    %v1053 = vpop.permute.xlu0 %1052
    %v1055 = vmul.f32 %v1037, %v1053
    %1056 = vmatpush.bf16.msra.mxu0 0
    %1057 = vmatpush.bf16.msra.mxu0 0
    %1058 = vmatpush.bf16.msra.mxu0 0
    %1059 = vmatpush.bf16.msra.mxu0 0
    %1060 = vmatpush.bf16.msra.mxu0 0
    %1061 = vmatpush.bf16.msra.mxu0 0
    %1062 = vmatpush.bf16.msra.mxu0 0
    %1063 = vmatpush.bf16.msra.mxu0 %v153
    %1064 = vmatmul.bf16.gmra.mxu0 %v237
    %v1065 = vpop.f32.mrf.mxu0
    %v1066 = vadd.f32 %v53, %v1065
    %v1067 = vpop.f32.mrf.mxu0
    %1068 = vdwg.mxu0
    %v1069 = vpack.c.bf16 %v984, %v984
    %1071 = vrot.lane.b32.xlu0 %v1069, 64
    %v1072 = vpop.permute.xlu0 %1071
    %v1074 = vsel %vm89, %v1072, 0
    %1076 = vmatpush.bf16.msra.mxu0 0
    %1077 = vmatpush.bf16.msra.mxu0 0
    %1078 = vmatpush.bf16.msra.mxu0 0
    %1079 = vmatpush.bf16.msra.mxu0 0
    %1080 = vmatpush.bf16.msra.mxu0 0
    %1081 = vmatpush.bf16.msra.mxu0 0
    %1082 = vmatpush.bf16.msra.mxu0 %v177
    %1083 = vmatpush.bf16.msra.mxu0 %v176
    %1084 = vmatmul.bf16.gmra.mxu0 %v1074
    %v1085 = vpop.f32.mrf.mxu0
    %v1086 = vadd.f32 0.0, %v1085
    %v1087 = vpop.f32.mrf.mxu0
    %1088 = vdwg.mxu0
    %v1089 = vadd.f32 %v1066, %v1086
    %v1090 = vxor.u32 %v1089, 2147483648
    %v1091 = vmul.f32 %v1090, 1.442695
    %v1092 = vpow.pop %v1091
    %v1093 = vadd.f32 %v1092, 1.0
    %v1094 = vrcp.pop %v1093
    %v1095 = vmul.f32 %v1093, %v1094
    %v1096 = vsub.f32 1.0, %v1095
    %v1097 = vmul.f32 %v1094, %v1096
    %v1098 = vadd.f32 %v1094, %v1097
    %vm1099 = vweird.f32 %v1093
    %vm1100 = vweird.f32 %v1094
    %vm1101 = vmor %vm1099, %vm1100
    %v1102 = vsel %vm1101, %v1094, %v1098
    %v1103 = vand.u32 2147483647, %v1093
    %vm1104 = vcmp.eq.f32.partialorder %v1103, 8.507059e+37
    %v1105 = vand.u32 %v1093, 2147483648
    %v1106 = vor.u32 1.1754944e-38, %v1105
    %v1107 = vsel %vm1104, %v1106, %v1102
    %v1108 = vmul.f32 1.0, %v1107
    %v1109 = vtanh.pop %v1089
    %v1110 = vmul.f32 %v1108, %v978
    %1112 = vrot.lane.b32.xlu0 %v1109, 32
    %v1113 = vpop.permute.xlu0 %1112
    %v1115 = vmul.f32 %v1108, %v1113
    %1117 = vrot.lane.b32.xlu0 %v1115, 32
    %v1118 = vpop.permute.xlu0 %1117
    %v1120 = vadd.f32 %v1110, %v1118
    %v1121 = vtanh.pop %v1120
    %1123 = vrot.lane.b32.xlu0 %v1121, 32
    %v1124 = vpop.permute.xlu0 %1123
    %v1126 = vmul.f32 %v1108, %v1124
    %1127 = vmatpush.bf16.msra.mxu0 0
    %1128 = vmatpush.bf16.msra.mxu0 0
    %1129 = vmatpush.bf16.msra.mxu0 0
    %1130 = vmatpush.bf16.msra.mxu0 0
    %1131 = vmatpush.bf16.msra.mxu0 0
    %1132 = vmatpush.bf16.msra.mxu0 0
    %1133 = vmatpush.bf16.msra.mxu0 0
    %1134 = vmatpush.bf16.msra.mxu0 %v62
    %1135 = vmatmul.bf16.gmra.mxu0 %v150
    %v1136 = vpop.f32.mrf.mxu0
    %v1137 = vadd.f32 %v49, %v1136
    %v1138 = vpop.f32.mrf.mxu0
    %1139 = vdwg.mxu0
    %v1140 = vpack.c.bf16 %v1055, %v1055
    %1142 = vrot.lane.b32.xlu0 %v1140, 64
    %v1143 = vpop.permute.xlu0 %1142
    %v1145 = vsel %vm89, %v1143, 0
    %1147 = vmatpush.bf16.msra.mxu0 0
    %1148 = vmatpush.bf16.msra.mxu0 0
    %1149 = vmatpush.bf16.msra.mxu0 0
    %1150 = vmatpush.bf16.msra.mxu0 0
    %1151 = vmatpush.bf16.msra.mxu0 0
    %1152 = vmatpush.bf16.msra.mxu0 0
    %1153 = vmatpush.bf16.msra.mxu0 %v86
    %1154 = vmatpush.bf16.msra.mxu0 %v85
    %1155 = vmatmul.bf16.gmra.mxu0 %v1145
    %v1156 = vpop.f32.mrf.mxu0
    %v1157 = vadd.f32 0.0, %v1156
    %v1158 = vpop.f32.mrf.mxu0
    %1159 = vdwg.mxu0
    %v1160 = vadd.f32 %v1137, %v1157
    %v1161 = vxor.u32 %v1160, 2147483648
    %v1162 = vmul.f32 %v1161, 1.442695
    %v1163 = vpow.pop %v1162
    %v1164 = vadd.f32 %v1163, 1.0
    %v1165 = vrcp.pop %v1164
    %v1166 = vmul.f32 %v1164, %v1165
    %v1167 = vsub.f32 1.0, %v1166
    %v1168 = vmul.f32 %v1165, %v1167
    %v1169 = vadd.f32 %v1165, %v1168
    %vm1170 = vweird.f32 %v1164
    %vm1171 = vweird.f32 %v1165
    %vm1172 = vmor %vm1170, %vm1171
    %v1173 = vsel %vm1172, %v1165, %v1169
    %v1174 = vand.u32 2147483647, %v1164
    %vm1175 = vcmp.eq.f32.partialorder %v1174, 8.507059e+37
    %v1176 = vand.u32 %v1164, 2147483648
    %v1177 = vor.u32 1.1754944e-38, %v1176
    %v1178 = vsel %vm1175, %v1177, %v1173
    %v1179 = vmul.f32 1.0, %v1178
    %v1180 = vtanh.pop %v1160
    %v1181 = vmul.f32 %v1179, %v1049
    %1183 = vrot.lane.b32.xlu0 %v1180, 32
    %v1184 = vpop.permute.xlu0 %1183
    %v1186 = vmul.f32 %v1179, %v1184
    %1188 = vrot.lane.b32.xlu0 %v1186, 32
    %v1189 = vpop.permute.xlu0 %1188
    %v1191 = vadd.f32 %v1181, %v1189
    %v1192 = vtanh.pop %v1191
    %1194 = vrot.lane.b32.xlu0 %v1192, 32
    %v1195 = vpop.permute.xlu0 %1194
    %v1197 = vmul.f32 %v1179, %v1195
    %1198 = vmatpush.bf16.msra.mxu0 0
    %1199 = vmatpush.bf16.msra.mxu0 0
    %1200 = vmatpush.bf16.msra.mxu0 0
    %1201 = vmatpush.bf16.msra.mxu0 0
    %1202 = vmatpush.bf16.msra.mxu0 0
    %1203 = vmatpush.bf16.msra.mxu0 0
    %1204 = vmatpush.bf16.msra.mxu0 0
    %1205 = vmatpush.bf16.msra.mxu0 %v153
    %1206 = vmatmul.bf16.gmra.mxu0 %v58
    %v1207 = vpop.f32.mrf.mxu0
    %v1208 = vadd.f32 %v53, %v1207
    %v1209 = vpop.f32.mrf.mxu0
    %1210 = vdwg.mxu0
    %v1211 = vpack.c.bf16 %v1126, %v1126
    %1213 = vrot.lane.b32.xlu0 %v1211, 64
    %v1214 = vpop.permute.xlu0 %1213
    %v1216 = vsel %vm89, %v1214, 0
    %1218 = vmatpush.bf16.msra.mxu0 0
    %1219 = vmatpush.bf16.msra.mxu0 0
    %1220 = vmatpush.bf16.msra.mxu0 0
    %1221 = vmatpush.bf16.msra.mxu0 0
    %1222 = vmatpush.bf16.msra.mxu0 0
    %1223 = vmatpush.bf16.msra.mxu0 0
    %1224 = vmatpush.bf16.msra.mxu0 %v177
    %1225 = vmatpush.bf16.msra.mxu0 %v176
    %1226 = vmatmul.bf16.gmra.mxu0 %v1216
    %v1227 = vpop.f32.mrf.mxu0
    %v1228 = vadd.f32 0.0, %v1227
    %v1229 = vpop.f32.mrf.mxu0
    %1230 = vdwg.mxu0
    %v1231 = vadd.f32 %v1208, %v1228
    %v1232 = vxor.u32 %v1231, 2147483648
    %v1233 = vmul.f32 %v1232, 1.442695
    %v1234 = vpow.pop %v1233
    %v1235 = vadd.f32 %v1234, 1.0
    %v1236 = vrcp.pop %v1235
    %v1237 = vmul.f32 %v1235, %v1236
    %v1238 = vsub.f32 1.0, %v1237
    %v1239 = vmul.f32 %v1236, %v1238
    %v1240 = vadd.f32 %v1236, %v1239
    %vm1241 = vweird.f32 %v1235
    %vm1242 = vweird.f32 %v1236
    %vm1243 = vmor %vm1241, %vm1242
    %v1244 = vsel %vm1243, %v1236, %v1240
    %v1245 = vand.u32 2147483647, %v1235
    %vm1246 = vcmp.eq.f32.partialorder %v1245, 8.507059e+37
    %v1247 = vand.u32 %v1235, 2147483648
    %v1248 = vor.u32 1.1754944e-38, %v1247
    %v1249 = vsel %vm1246, %v1248, %v1244
    %v1250 = vmul.f32 1.0, %v1249
    %v1251 = vtanh.pop %v1231
    %v1252 = vmul.f32 %v1250, %v1120
    %1254 = vrot.lane.b32.xlu0 %v1251, 32
    %v1255 = vpop.permute.xlu0 %1254
    %v1257 = vmul.f32 %v1250, %v1255
    %1259 = vrot.lane.b32.xlu0 %v1257, 32
    %v1260 = vpop.permute.xlu0 %1259
    %v1262 = vadd.f32 %v1252, %v1260
    %v1263 = vtanh.pop %v1262
    %1265 = vrot.lane.b32.xlu0 %v1263, 32
    %v1266 = vpop.permute.xlu0 %1265
    %v1268 = vmul.f32 %v1250, %v1266
    %v1269 = vpack.c.bf16 %v1197, %v1197
    %v1270 = vld [vmem:[%s7] sm:$0xf]
    %v1271 = vld [vmem:[%s7 + $0x4] sm:$0xf]
    %v1272 = vld [vmem:[%s7 + $0x8] sm:$0xf]
    %v1273 = vld [vmem:[%s7 + $0xc] sm:$0xf]
    %v1274 = vpack.c.bf16 %v1268, %v1268
    %v1275 = vld [vmem:[%s8] sm:$0xf]
    %v1276 = vld [vmem:[%s8 + $0x4] sm:$0xf]
    %v1277 = vld [vmem:[%s8 + $0x8] sm:$0xf]
    %v1278 = vld [vmem:[%s8 + $0xc] sm:$0xf]
    %1280 = vrot.lane.b32.xlu0 %v1274, 64
    %v1281 = vpop.permute.xlu0 %1280
    %v1286 = vunpack.c.l.b16 %v1275
    %v1287 = vunpack.c.l.b16 %v1276
    %v1288 = vunpack.c.l.b16 %v1277
    %v1289 = vunpack.c.l.b16 %v1278
    %v1290 = vpack.c.b16 %v1287, %v1286
    %v1291 = vpack.c.b16 %v1289, %v1288
    %v1295 = vsel %vm89, %v1281, 0
    %1297 = vmatpush.bf16.msra.mxu0 0
    %1298 = vmatpush.bf16.msra.mxu0 0
    %1299 = vmatpush.bf16.msra.mxu0 0
    %1300 = vmatpush.bf16.msra.mxu0 0
    %1301 = vmatpush.bf16.msra.mxu0 0
    %1302 = vmatpush.bf16.msra.mxu0 0
    %1303 = vmatpush.bf16.msra.mxu0 %v1291
    %1304 = vmatpush.bf16.msra.mxu0 %v1290
    %1305 = vmatmul.bf16.gmra.mxu0 %v1295
    %v1306 = vpop.f32.mrf.mxu0
    %v1307 = vadd.f32 0.0, %v1306
    %v1308 = vpop.f32.mrf.mxu0
    %1309 = vdwg.mxu0
    %1311 = vrot.lane.b32.xlu0 %v1269, 64
    %v1312 = vpop.permute.xlu0 %1311
    %v1317 = vunpack.c.l.b16 %v1270
    %v1318 = vunpack.c.l.b16 %v1271
    %v1319 = vunpack.c.l.b16 %v1272
    %v1320 = vunpack.c.l.b16 %v1273
    %v1321 = vpack.c.b16 %v1318, %v1317
    %v1322 = vpack.c.b16 %v1320, %v1319
    %v1326 = vsel %vm89, %v1312, 0
    %1328 = vmatpush.bf16.msra.mxu0 0
    %1329 = vmatpush.bf16.msra.mxu0 0
    %1330 = vmatpush.bf16.msra.mxu0 0
    %1331 = vmatpush.bf16.msra.mxu0 0
    %1332 = vmatpush.bf16.msra.mxu0 0
    %1333 = vmatpush.bf16.msra.mxu0 0
    %1334 = vmatpush.bf16.msra.mxu0 %v1322
    %1335 = vmatpush.bf16.msra.mxu0 %v1321
    %1336 = vmatmul.bf16.gmra.mxu0 %v1326
    %v1337 = vpop.f32.mrf.mxu0
    %v1338 = vadd.f32 %v1307, %v1337
    %v1339 = vpop.f32.mrf.mxu0
    %1340 = vdwg.mxu0
    %v1341 = vld [vmem:[%s9] sm:$0x1]
    %v1343 = vperm.slane %v1341, 0
    %v1345 = vadd.f32 %v1338, %v1343
    %vm1346 = vcmask 9216
    %1347 = vst.msk [vmem:[#allocation2] sm:$0x3] %vm1346, %v1345
    // Predicated region
    $region42: #{lstm_forward.1} parent=1 // pred_check
      _
    $region43: #{lstm_forward.1} parent=1 // pred_check_branch
      %1349 = sbr.rel (0) target = $region45
    $region44: #{lstm_forward.1} parent=1 // pred_region
      %1351 = vsyncadd [#allocation3], 0
      %s1353 = sshll.u32 [#allocation2], 4
      %s1354 = int_to_ptr.vmem [resolvable:$true] %s1353
      %s1355 = sshll.u32 %s10, 4
      %s1356 = int_to_ptr.hbm [resolvable:$true] %s1355
      %1358 = dma.vmem_to_hbm [thread:$0]  %s1354, 32, %s1356, [#allocation3]
    $region45: #{lstm_forward.1} parent=1 // pred_fallthru
      _
    // Predicated region
    $region46: #{lstm_forward.1} parent=1 // pred_check
      _
    $region47: #{lstm_forward.1} parent=1 // pred_check_branch
      %1360 = sbr.rel (0) target = $region49
    $region48: #{lstm_forward.1} parent=1 // pred_region
      %1362 = dma.done [#allocation3], 32
    $region49: #{lstm_forward.1} parent=1 // pred_fallthru
      _
    %1363 = vsyncpa [#allocation3], 1

</llo_original>
